<compile_context>
chip_gen: v7x
topology: tpu7x:2x2x1
jax: 0.10.0
libtpu: 0.0.40
codegen_flags: <defaults>
</compile_context>

<pallas_src>
import jax
import jax.numpy as jnp
from jax.experimental import pallas as pl
from jax.experimental.pallas import tpu as pltpu


# ------------------------- fused MLP + multi-layer LSTM kernel ----------------
def make_decoder_kernel(n_layers, seq_len, lstm_batch, hidden_dim):
    L, T, Bl, H = n_layers, seq_len, lstm_batch, hidden_dim

    def kernel(z_ref, w1_ref, b1_ref, w2_ref, b2_ref,
               h0_ref, c0_ref, wih_ref, whh_ref, blstm_ref,
               out_ref):
        # ----------------- MLP: relu(linear1) -> sigmoid(linear2) -----------------
        # Matmul operands in bf16 (native MXU path); accumulation and all
        # element-wise math in f32.
        z = z_ref[...].astype(w1_ref.dtype)                               # (T, latent)
        h1 = jnp.dot(z, w1_ref[...],
                     preferred_element_type=jnp.float32) + b1_ref[...]    # (T, 512) f32
        h1 = jnp.maximum(h1, 0.0)                                         # F.relu
        xflat = jnp.dot(h1.astype(w2_ref.dtype), w2_ref[...],
                        preferred_element_type=jnp.float32) + b2_ref[...] # (T, Bl*H) f32
        xflat = jax.nn.sigmoid(xflat)                                     # lane-dense (2,128)

        # x.view(batch_size, -1, hidden_dim): value-level only (lane slices +
        # one sublane concat); no scratch buffer, no scatter stores.
        layer_in = jnp.concatenate(
            [xflat[t:t + 1, b * H:(b + 1) * H] for t in range(T) for b in range(Bl)],
            axis=0)                                                       # (T*Bl, H)

        # ----------------- multi-layer LSTM (gate order i, f, g, o) ---------------
        # T and L are tiny (2 each) so static unrolling is fine; switch to
        # lax.fori_loop with (h, c) carries if they ever grow.
        hs = []
        for l in range(L):                       # static, small
            wih = wih_ref[l]                     # (H, 4H)
            whh = whh_ref[l]                     # (H, 4H)
            bias = blstm_ref[l:l + 1, :]         # (1, 4H)

            # Hoisted, batched input projection: one (T*Bl,H)@(H,4H) matmul and one
            # bias broadcast per layer; off the serial recurrence path.
            gx_all = jnp.dot(layer_in, wih,
                             preferred_element_type=jnp.float32) + bias   # (T*Bl, 4H)

            # Recurrent state carried purely in registers.
            h = h0_ref[l]                        # (Bl, H)
            c = c0_ref[l]                        # (Bl, H)
            hs = []
            for t in range(T):                   # static, small
                gates = gx_all[t * Bl:(t + 1) * Bl, :] + jnp.dot(
                    h, whh, preferred_element_type=jnp.float32)           # (Bl, 4H)
                sg = jax.nn.sigmoid(gates)       # one full-width (4,128) EUP pass
                i = sg[:, 0 * H:1 * H]
                f = sg[:, 1 * H:2 * H]
                o = sg[:, 3 * H:4 * H]
                g = jnp.tanh(gates[:, 2 * H:3 * H])
                c = f * c + i * g
                h = o * jnp.tanh(c)
                hs.append(h)                     # register value (never stored to VMEM)

            if l + 1 < L:                        # next layer's input, register value
                layer_in = jnp.concatenate(hs, axis=0)                    # (T*Bl, H)

        # ----------------- lane-dense output store --------------------------------
        # Row t of the output is flatten(h_t): fold the Bl sublane rows into 128
        # lanes, then store the whole (T, Bl*H) block in a single full-lane store.
        rows = [jnp.concatenate([hs[t][b:b + 1, :] for b in range(Bl)], axis=1)
                for t in range(T)]                                        # T x (1, Bl*H)
        out_ref[...] = jnp.concatenate(rows, axis=0)                      # (T, Bl*H)

    return kernel


# ------------------------- DecoderLayers.forward ------------------------------
def decoder_layers_forward(z, hidden_state, params):
    w1, b1, w2, b2 = params["w1"], params["b1"], params["w2"], params["b2"]
    wih, whh, blstm = params["wih"], params["whh"], params["blstm"]
    h0, c0 = hidden_state

    batch_size = z.shape[0]                      # == seq_len for the LSTM
    hidden_dim = wih.shape[1]
    linear2_out = w2.shape[1]
    lstm_batch = linear2_out // hidden_dim
    n_layers = wih.shape[0]
    T, Bl, H = batch_size, lstm_batch, hidden_dim

    # bf16 matmul weights: halves the only non-trivial HBM->VMEM DMA (w2).
    # Biases and all LSTM / gate math stay f32.
    w1 = w1.astype(jnp.bfloat16)
    w2 = w2.astype(jnp.bfloat16)

    vmem = pl.BlockSpec(memory_space=pltpu.MemorySpace.VMEM)
    out2d = pl.pallas_call(
        make_decoder_kernel(n_layers, T, Bl, H),
        out_shape=jax.ShapeDtypeStruct((T, Bl * H), jnp.float32),  # lane-dense (2,128)
        in_specs=[vmem] * 10,
        out_specs=vmem,
    )(z, w1, b1, w2, b2, h0, c0, wih, whh, blstm)

    # Row-major-identical reshape back to (seq_len, lstm_batch, hidden_dim).
    return out2d.reshape(T, Bl, H)


# ------------------------- pure-JAX reference (for checking) ------------------
def reference_forward(z, hidden_state, params):
    x = jax.nn.relu(z @ params["w1"] + params["b1"][0])
    x = jax.nn.sigmoid(x @ params["w2"] + params["b2"][0])
    batch_size = z.shape[0]
    H = params["wih"].shape[1]
    x = x.reshape(batch_size, -1, H)
    h, c = hidden_state
    h, c = jnp.array(h), jnp.array(c)
    L = h.shape[0]
    T = x.shape[0]
    layer_in = x
    for l in range(L):
        hs = []
        hl, cl = h[l], c[l]
        for t in range(T):
            gates = layer_in[t] @ params["wih"][l] + hl @ params["whh"][l] + params["blstm"][l]
            i, f, g, o = jnp.split(gates, 4, axis=-1)
            i, f, o = jax.nn.sigmoid(i), jax.nn.sigmoid(f), jax.nn.sigmoid(o)
            g = jnp.tanh(g)
            cl = f * cl + i * g
            hl = o * jnp.tanh(cl)
            hs.append(hl)
        layer_in = jnp.stack(hs, axis=0)
    return layer_in


if __name__ == "__main__":
    # Small shapes consistent with the module's forward.
    batch_size = 2
    latent_dims = 16
    hidden_dim = 32          # == BASE_SIZE (LSTM input size)
    n_layers = 2
    linear2_out = 128        # conv_1_out_size * conv_1_out_channels, divisible by hidden_dim
    lstm_batch = linear2_out // hidden_dim   # 4 (the "-1" of the view)
    seq_len = batch_size                     # PyTorch LSTM default is (seq, batch, input)

    key = jax.random.PRNGKey(0)
    ks = jax.random.split(key, 10)

    def init(k, shape, fan_in):
        bound = 1.0 / jnp.sqrt(jnp.float32(fan_in))
        return jax.random.uniform(k, shape, jnp.float32, -bound, bound)

    params = {
        # linear1: latent_dims -> 512 ; linear2: 512 -> linear2_out (weights stored (in, out))
        "w1": init(ks[0], (latent_dims, 512), latent_dims),
        "b1": init(ks[1], (1, 512), latent_dims),
        "w2": init(ks[2], (512, linear2_out), 512),
        "b2": init(ks[3], (1, linear2_out), 512),
        # LSTM(BASE_SIZE=hidden_dim, hidden_dim, n_layers), gate order i,f,g,o
        "wih": init(ks[4], (n_layers, hidden_dim, 4 * hidden_dim), hidden_dim),
        "whh": init(ks[5], (n_layers, hidden_dim, 4 * hidden_dim), hidden_dim),
        "blstm": init(ks[6], (n_layers, 4 * hidden_dim), hidden_dim),  # b_ih + b_hh combined
    }

    z = jax.random.normal(ks[7], (batch_size, latent_dims), jnp.float32)
    h0 = jax.random.normal(ks[8], (n_layers, lstm_batch, hidden_dim), jnp.float32) * 0.1
    c0 = jax.random.normal(ks[9], (n_layers, lstm_batch, hidden_dim), jnp.float32) * 0.1

    out = decoder_layers_forward(z, (h0, c0), params)
    out = jax.block_until_ready(out)

    ref = reference_forward(z, (h0, c0), params)
    assert out.shape == (seq_len, lstm_batch, hidden_dim), out.shape
    assert jnp.allclose(out, ref, rtol=1e-2, atol=1e-2), "mismatch vs reference"

    print("KERNEL_OK")
</pallas_src>

<mosaic_0001>
module attributes {stable_mosaic.version = 11 : i64} {
  func.func @kernel(%arg0: memref<2x16xf32, #tpu.memory_space<vmem>>, %arg1: memref<16x512xbf16, #tpu.memory_space<vmem>>, %arg2: memref<1x512xf32, #tpu.memory_space<vmem>>, %arg3: memref<512x128xbf16, #tpu.memory_space<vmem>>, %arg4: memref<1x128xf32, #tpu.memory_space<vmem>>, %arg5: memref<2x4x32xf32, #tpu.memory_space<vmem>>, %arg6: memref<2x4x32xf32, #tpu.memory_space<vmem>>, %arg7: memref<2x32x128xf32, #tpu.memory_space<vmem>>, %arg8: memref<2x32x128xf32, #tpu.memory_space<vmem>>, %arg9: memref<2x128xf32, #tpu.memory_space<vmem>>, %arg10: memref<2x128xf32, #tpu.memory_space<vmem>>) attributes {dimension_semantics = [], scalar_prefetch = 0 : i64, scratch_operands = 0 : i64, tpu.core_type = #tpu.core_type<tc>} {
    %c0 = arith.constant 0 : index
    %c0_0 = arith.constant 0 : index
    %0 = vector.load %arg0[%c0, %c0_0] : memref<2x16xf32, #tpu.memory_space<vmem>>, vector<2x16xf32>
    %1 = arith.truncf %0 : vector<2x16xf32> to vector<2x16xbf16>
    %c0_1 = arith.constant 0 : index
    %c0_2 = arith.constant 0 : index
    %2 = vector.load %arg1[%c0_1, %c0_2] : memref<16x512xbf16, #tpu.memory_space<vmem>>, vector<16x512xbf16>
    %cst = arith.constant dense<0.000000e+00> : vector<2x512xf32>
    %3 = tpu.matmul %1, %2, %cst {dimension_numbers = #tpu.dot_dimension_numbers<[1], [0], [0], [1], [0, 0, 1, 1], [], []>} : vector<2x16xbf16>, vector<16x512xbf16>, vector<2x512xf32> -> vector<2x512xf32>
    %c0_3 = arith.constant 0 : index
    %c0_4 = arith.constant 0 : index
    %4 = vector.load %arg2[%c0_3, %c0_4] : memref<1x512xf32, #tpu.memory_space<vmem>>, vector<1x512xf32>
    %5 = vector.broadcast %4 : vector<1x512xf32> to vector<2x512xf32>
    %6 = arith.addf %3, %5 : vector<2x512xf32>
    %cst_5 = arith.constant 0.000000e+00 : f32
    %7 = vector.broadcast %cst_5 : f32 to vector<2x512xf32>
    %8 = arith.maximumf %6, %7 : vector<2x512xf32>
    %9 = arith.truncf %8 : vector<2x512xf32> to vector<2x512xbf16>
    %c0_6 = arith.constant 0 : index
    %c0_7 = arith.constant 0 : index
    %10 = vector.load %arg3[%c0_6, %c0_7] : memref<512x128xbf16, #tpu.memory_space<vmem>>, vector<512x128xbf16>
    %cst_8 = arith.constant dense<0.000000e+00> : vector<2x128xf32>
    %11 = tpu.matmul %9, %10, %cst_8 {dimension_numbers = #tpu.dot_dimension_numbers<[1], [0], [0], [1], [0, 0, 1, 1], [], []>} : vector<2x512xbf16>, vector<512x128xbf16>, vector<2x128xf32> -> vector<2x128xf32>
    %c0_9 = arith.constant 0 : index
    %c0_10 = arith.constant 0 : index
    %12 = vector.load %arg4[%c0_9, %c0_10] : memref<1x128xf32, #tpu.memory_space<vmem>>, vector<1x128xf32>
    %13 = vector.broadcast %12 : vector<1x128xf32> to vector<2x128xf32>
    %14 = arith.addf %11, %13 : vector<2x128xf32>
    %15 = arith.negf %14 : vector<2x128xf32>
    %16 = math.exp %15 : vector<2x128xf32>
    %cst_11 = arith.constant 1.000000e+00 : f32
    %17 = vector.broadcast %cst_11 : f32 to vector<2x128xf32>
    %18 = arith.addf %17, %16 : vector<2x128xf32>
    %19 = arith.divf %17, %18 : vector<2x128xf32>
    %20 = vector.extract_strided_slice %19 {offsets = [0, 0], sizes = [1, 32], strides = [1, 1]} : vector<2x128xf32> to vector<1x32xf32>
    %21 = vector.extract_strided_slice %19 {offsets = [0, 32], sizes = [1, 32], strides = [1, 1]} : vector<2x128xf32> to vector<1x32xf32>
    %22 = vector.extract_strided_slice %19 {offsets = [0, 64], sizes = [1, 32], strides = [1, 1]} : vector<2x128xf32> to vector<1x32xf32>
    %23 = vector.extract_strided_slice %19 {offsets = [0, 96], sizes = [1, 32], strides = [1, 1]} : vector<2x128xf32> to vector<1x32xf32>
    %24 = vector.extract_strided_slice %19 {offsets = [1, 0], sizes = [1, 32], strides = [1, 1]} : vector<2x128xf32> to vector<1x32xf32>
    %25 = vector.extract_strided_slice %19 {offsets = [1, 32], sizes = [1, 32], strides = [1, 1]} : vector<2x128xf32> to vector<1x32xf32>
    %26 = vector.extract_strided_slice %19 {offsets = [1, 64], sizes = [1, 32], strides = [1, 1]} : vector<2x128xf32> to vector<1x32xf32>
    %27 = vector.extract_strided_slice %19 {offsets = [1, 96], sizes = [1, 32], strides = [1, 1]} : vector<2x128xf32> to vector<1x32xf32>
    %28 = tpu.concatenate %20, %21, %22, %23, %24, %25, %26, %27 in 0 : vector<1x32xf32>, vector<1x32xf32>, vector<1x32xf32>, vector<1x32xf32>, vector<1x32xf32>, vector<1x32xf32>, vector<1x32xf32>, vector<1x32xf32> -> vector<8x32xf32>
    %c0_12 = arith.constant 0 : index
    %c0_13 = arith.constant 0 : index
    %c0_14 = arith.constant 0 : index
    %29 = vector.load %arg7[%c0_12, %c0_13, %c0_14] : memref<2x32x128xf32, #tpu.memory_space<vmem>>, vector<1x32x128xf32>
    %30 = vector.shape_cast %29 : vector<1x32x128xf32> to vector<32x128xf32>
    %c0_15 = arith.constant 0 : index
    %c0_16 = arith.constant 0 : index
    %c0_17 = arith.constant 0 : index
    %31 = vector.load %arg8[%c0_15, %c0_16, %c0_17] : memref<2x32x128xf32, #tpu.memory_space<vmem>>, vector<1x32x128xf32>
    %32 = vector.shape_cast %31 : vector<1x32x128xf32> to vector<32x128xf32>
    %c0_18 = arith.constant 0 : index
    %c0_19 = arith.constant 0 : index
    %33 = vector.load %arg9[%c0_18, %c0_19] : memref<2x128xf32, #tpu.memory_space<vmem>>, vector<1x128xf32>
    %cst_20 = arith.constant dense<0.000000e+00> : vector<8x128xf32>
    %34 = tpu.matmul %28, %30, %cst_20 {dimension_numbers = #tpu.dot_dimension_numbers<[1], [0], [0], [1], [0, 0, 1, 1], [], []>} : vector<8x32xf32>, vector<32x128xf32>, vector<8x128xf32> -> vector<8x128xf32>
    %35 = vector.broadcast %33 : vector<1x128xf32> to vector<8x128xf32>
    %36 = arith.addf %34, %35 : vector<8x128xf32>
    %c0_21 = arith.constant 0 : index
    %c0_22 = arith.constant 0 : index
    %c0_23 = arith.constant 0 : index
    %37 = vector.load %arg5[%c0_21, %c0_22, %c0_23] : memref<2x4x32xf32, #tpu.memory_space<vmem>>, vector<1x4x32xf32>
    %38 = vector.shape_cast %37 : vector<1x4x32xf32> to vector<4x32xf32>
    %c0_24 = arith.constant 0 : index
    %c0_25 = arith.constant 0 : index
    %c0_26 = arith.constant 0 : index
    %39 = vector.load %arg6[%c0_24, %c0_25, %c0_26] : memref<2x4x32xf32, #tpu.memory_space<vmem>>, vector<1x4x32xf32>
    %40 = vector.shape_cast %39 : vector<1x4x32xf32> to vector<4x32xf32>
    %41 = vector.extract_strided_slice %36 {offsets = [0, 0], sizes = [4, 128], strides = [1, 1]} : vector<8x128xf32> to vector<4x128xf32>
    %cst_27 = arith.constant dense<0.000000e+00> : vector<4x128xf32>
    %42 = tpu.matmul %38, %32, %cst_27 {dimension_numbers = #tpu.dot_dimension_numbers<[1], [0], [0], [1], [0, 0, 1, 1], [], []>} : vector<4x32xf32>, vector<32x128xf32>, vector<4x128xf32> -> vector<4x128xf32>
    %43 = arith.addf %41, %42 : vector<4x128xf32>
    %44 = arith.negf %43 : vector<4x128xf32>
    %45 = math.exp %44 : vector<4x128xf32>
    %cst_28 = arith.constant 1.000000e+00 : f32
    %46 = vector.broadcast %cst_28 : f32 to vector<4x128xf32>
    %47 = arith.addf %46, %45 : vector<4x128xf32>
    %48 = arith.divf %46, %47 : vector<4x128xf32>
    %49 = vector.extract_strided_slice %48 {offsets = [0, 0], sizes = [4, 32], strides = [1, 1]} : vector<4x128xf32> to vector<4x32xf32>
    %50 = vector.extract_strided_slice %48 {offsets = [0, 32], sizes = [4, 32], strides = [1, 1]} : vector<4x128xf32> to vector<4x32xf32>
    %51 = vector.extract_strided_slice %48 {offsets = [0, 96], sizes = [4, 32], strides = [1, 1]} : vector<4x128xf32> to vector<4x32xf32>
    %52 = vector.extract_strided_slice %43 {offsets = [0, 64], sizes = [4, 32], strides = [1, 1]} : vector<4x128xf32> to vector<4x32xf32>
    %53 = math.tanh %52 : vector<4x32xf32>
    %54 = arith.mulf %50, %40 : vector<4x32xf32>
    %55 = arith.mulf %49, %53 : vector<4x32xf32>
    %56 = arith.addf %54, %55 : vector<4x32xf32>
    %57 = math.tanh %56 : vector<4x32xf32>
    %58 = arith.mulf %51, %57 : vector<4x32xf32>
    %59 = vector.extract_strided_slice %36 {offsets = [4, 0], sizes = [4, 128], strides = [1, 1]} : vector<8x128xf32> to vector<4x128xf32>
    %cst_29 = arith.constant dense<0.000000e+00> : vector<4x128xf32>
    %60 = tpu.matmul %58, %32, %cst_29 {dimension_numbers = #tpu.dot_dimension_numbers<[1], [0], [0], [1], [0, 0, 1, 1], [], []>} : vector<4x32xf32>, vector<32x128xf32>, vector<4x128xf32> -> vector<4x128xf32>
    %61 = arith.addf %59, %60 : vector<4x128xf32>
    %62 = arith.negf %61 : vector<4x128xf32>
    %63 = math.exp %62 : vector<4x128xf32>
    %cst_30 = arith.constant 1.000000e+00 : f32
    %64 = vector.broadcast %cst_30 : f32 to vector<4x128xf32>
    %65 = arith.addf %64, %63 : vector<4x128xf32>
    %66 = arith.divf %64, %65 : vector<4x128xf32>
    %67 = vector.extract_strided_slice %66 {offsets = [0, 0], sizes = [4, 32], strides = [1, 1]} : vector<4x128xf32> to vector<4x32xf32>
    %68 = vector.extract_strided_slice %66 {offsets = [0, 32], sizes = [4, 32], strides = [1, 1]} : vector<4x128xf32> to vector<4x32xf32>
    %69 = vector.extract_strided_slice %66 {offsets = [0, 96], sizes = [4, 32], strides = [1, 1]} : vector<4x128xf32> to vector<4x32xf32>
    %70 = vector.extract_strided_slice %61 {offsets = [0, 64], sizes = [4, 32], strides = [1, 1]} : vector<4x128xf32> to vector<4x32xf32>
    %71 = math.tanh %70 : vector<4x32xf32>
    %72 = arith.mulf %68, %56 : vector<4x32xf32>
    %73 = arith.mulf %67, %71 : vector<4x32xf32>
    %74 = arith.addf %72, %73 : vector<4x32xf32>
    %75 = math.tanh %74 : vector<4x32xf32>
    %76 = arith.mulf %69, %75 : vector<4x32xf32>
    %77 = tpu.concatenate %58, %76 in 0 : vector<4x32xf32>, vector<4x32xf32> -> vector<8x32xf32>
    %c1 = arith.constant 1 : index
    %c0_31 = arith.constant 0 : index
    %c0_32 = arith.constant 0 : index
    %78 = vector.load %arg7[%c1, %c0_31, %c0_32] : memref<2x32x128xf32, #tpu.memory_space<vmem>>, vector<1x32x128xf32>
    %79 = vector.shape_cast %78 : vector<1x32x128xf32> to vector<32x128xf32>
    %c1_33 = arith.constant 1 : index
    %c0_34 = arith.constant 0 : index
    %c0_35 = arith.constant 0 : index
    %80 = vector.load %arg8[%c1_33, %c0_34, %c0_35] : memref<2x32x128xf32, #tpu.memory_space<vmem>>, vector<1x32x128xf32>
    %81 = vector.shape_cast %80 : vector<1x32x128xf32> to vector<32x128xf32>
    %c1_36 = arith.constant 1 : index
    %c0_37 = arith.constant 0 : index
    %82 = vector.load %arg9[%c1_36, %c0_37] : memref<2x128xf32, #tpu.memory_space<vmem>>, vector<1x128xf32>
    %cst_38 = arith.constant dense<0.000000e+00> : vector<8x128xf32>
    %83 = tpu.matmul %77, %79, %cst_38 {dimension_numbers = #tpu.dot_dimension_numbers<[1], [0], [0], [1], [0, 0, 1, 1], [], []>} : vector<8x32xf32>, vector<32x128xf32>, vector<8x128xf32> -> vector<8x128xf32>
    %84 = vector.broadcast %82 : vector<1x128xf32> to vector<8x128xf32>
    %85 = arith.addf %83, %84 : vector<8x128xf32>
    %c1_39 = arith.constant 1 : index
    %c0_40 = arith.constant 0 : index
    %c0_41 = arith.constant 0 : index
    %86 = vector.load %arg5[%c1_39, %c0_40, %c0_41] : memref<2x4x32xf32, #tpu.memory_space<vmem>>, vector<1x4x32xf32>
    %87 = vector.shape_cast %86 : vector<1x4x32xf32> to vector<4x32xf32>
    %c1_42 = arith.constant 1 : index
    %c0_43 = arith.constant 0 : index
    %c0_44 = arith.constant 0 : index
    %88 = vector.load %arg6[%c1_42, %c0_43, %c0_44] : memref<2x4x32xf32, #tpu.memory_space<vmem>>, vector<1x4x32xf32>
    %89 = vector.shape_cast %88 : vector<1x4x32xf32> to vector<4x32xf32>
    %90 = vector.extract_strided_slice %85 {offsets = [0, 0], sizes = [4, 128], strides = [1, 1]} : vector<8x128xf32> to vector<4x128xf32>
    %cst_45 = arith.constant dense<0.000000e+00> : vector<4x128xf32>
    %91 = tpu.matmul %87, %81, %cst_45 {dimension_numbers = #tpu.dot_dimension_numbers<[1], [0], [0], [1], [0, 0, 1, 1], [], []>} : vector<4x32xf32>, vector<32x128xf32>, vector<4x128xf32> -> vector<4x128xf32>
    %92 = arith.addf %90, %91 : vector<4x128xf32>
    %93 = arith.negf %92 : vector<4x128xf32>
    %94 = math.exp %93 : vector<4x128xf32>
    %cst_46 = arith.constant 1.000000e+00 : f32
    %95 = vector.broadcast %cst_46 : f32 to vector<4x128xf32>
    %96 = arith.addf %95, %94 : vector<4x128xf32>
    %97 = arith.divf %95, %96 : vector<4x128xf32>
    %98 = vector.extract_strided_slice %97 {offsets = [0, 0], sizes = [4, 32], strides = [1, 1]} : vector<4x128xf32> to vector<4x32xf32>
    %99 = vector.extract_strided_slice %97 {offsets = [0, 32], sizes = [4, 32], strides = [1, 1]} : vector<4x128xf32> to vector<4x32xf32>
    %100 = vector.extract_strided_slice %97 {offsets = [0, 96], sizes = [4, 32], strides = [1, 1]} : vector<4x128xf32> to vector<4x32xf32>
    %101 = vector.extract_strided_slice %92 {offsets = [0, 64], sizes = [4, 32], strides = [1, 1]} : vector<4x128xf32> to vector<4x32xf32>
    %102 = math.tanh %101 : vector<4x32xf32>
    %103 = arith.mulf %99, %89 : vector<4x32xf32>
    %104 = arith.mulf %98, %102 : vector<4x32xf32>
    %105 = arith.addf %103, %104 : vector<4x32xf32>
    %106 = math.tanh %105 : vector<4x32xf32>
    %107 = arith.mulf %100, %106 : vector<4x32xf32>
    %108 = vector.extract_strided_slice %85 {offsets = [4, 0], sizes = [4, 128], strides = [1, 1]} : vector<8x128xf32> to vector<4x128xf32>
    %cst_47 = arith.constant dense<0.000000e+00> : vector<4x128xf32>
    %109 = tpu.matmul %107, %81, %cst_47 {dimension_numbers = #tpu.dot_dimension_numbers<[1], [0], [0], [1], [0, 0, 1, 1], [], []>} : vector<4x32xf32>, vector<32x128xf32>, vector<4x128xf32> -> vector<4x128xf32>
    %110 = arith.addf %108, %109 : vector<4x128xf32>
    %111 = arith.negf %110 : vector<4x128xf32>
    %112 = math.exp %111 : vector<4x128xf32>
    %cst_48 = arith.constant 1.000000e+00 : f32
    %113 = vector.broadcast %cst_48 : f32 to vector<4x128xf32>
    %114 = arith.addf %113, %112 : vector<4x128xf32>
    %115 = arith.divf %113, %114 : vector<4x128xf32>
    %116 = vector.extract_strided_slice %115 {offsets = [0, 0], sizes = [4, 32], strides = [1, 1]} : vector<4x128xf32> to vector<4x32xf32>
    %117 = vector.extract_strided_slice %115 {offsets = [0, 32], sizes = [4, 32], strides = [1, 1]} : vector<4x128xf32> to vector<4x32xf32>
    %118 = vector.extract_strided_slice %115 {offsets = [0, 96], sizes = [4, 32], strides = [1, 1]} : vector<4x128xf32> to vector<4x32xf32>
    %119 = vector.extract_strided_slice %110 {offsets = [0, 64], sizes = [4, 32], strides = [1, 1]} : vector<4x128xf32> to vector<4x32xf32>
    %120 = math.tanh %119 : vector<4x32xf32>
    %121 = arith.mulf %117, %105 : vector<4x32xf32>
    %122 = arith.mulf %116, %120 : vector<4x32xf32>
    %123 = arith.addf %121, %122 : vector<4x32xf32>
    %124 = math.tanh %123 : vector<4x32xf32>
    %125 = arith.mulf %118, %124 : vector<4x32xf32>
    %126 = vector.extract_strided_slice %107 {offsets = [0, 0], sizes = [1, 32], strides = [1, 1]} : vector<4x32xf32> to vector<1x32xf32>
    %127 = vector.extract_strided_slice %107 {offsets = [1, 0], sizes = [1, 32], strides = [1, 1]} : vector<4x32xf32> to vector<1x32xf32>
    %128 = vector.extract_strided_slice %107 {offsets = [2, 0], sizes = [1, 32], strides = [1, 1]} : vector<4x32xf32> to vector<1x32xf32>
    %129 = vector.extract_strided_slice %107 {offsets = [3, 0], sizes = [1, 32], strides = [1, 1]} : vector<4x32xf32> to vector<1x32xf32>
    %130 = tpu.concatenate %126, %127, %128, %129 in 1 : vector<1x32xf32>, vector<1x32xf32>, vector<1x32xf32>, vector<1x32xf32> -> vector<1x128xf32>
    %131 = vector.extract_strided_slice %125 {offsets = [0, 0], sizes = [1, 32], strides = [1, 1]} : vector<4x32xf32> to vector<1x32xf32>
    %132 = vector.extract_strided_slice %125 {offsets = [1, 0], sizes = [1, 32], strides = [1, 1]} : vector<4x32xf32> to vector<1x32xf32>
    %133 = vector.extract_strided_slice %125 {offsets = [2, 0], sizes = [1, 32], strides = [1, 1]} : vector<4x32xf32> to vector<1x32xf32>
    %134 = vector.extract_strided_slice %125 {offsets = [3, 0], sizes = [1, 32], strides = [1, 1]} : vector<4x32xf32> to vector<1x32xf32>
    %135 = tpu.concatenate %131, %132, %133, %134 in 1 : vector<1x32xf32>, vector<1x32xf32>, vector<1x32xf32>, vector<1x32xf32> -> vector<1x128xf32>
    %136 = tpu.concatenate %130, %135 in 0 : vector<1x128xf32>, vector<1x128xf32> -> vector<2x128xf32>
    %c0_49 = arith.constant 0 : index
    %c0_50 = arith.constant 0 : index
    %137 = vector.load %arg10[%c0_49, %c0_50] : memref<2x128xf32, #tpu.memory_space<vmem>>, vector<2x128xf32>
    tpu.vector_store %arg10[%c0_49, %c0_50], %136 {strides = array<i32>} : memref<2x128xf32, #tpu.memory_space<vmem>>, vector<2x128xf32>,
    return
  }
}

</mosaic_0001>

<llo_original>
// kernel: tpu_custom_call.1
$region0: #{tpu_custom_call.1}
  #allocation0 [shape = 'u32[]', space=smem, size = 0x4, offset = 0x4, fixed_abs, tag = 'smem constant byte address 0x4 - core index']
  #allocation1 [shape = 'u32[144,128]{1,0:T(1,128)}', space=vmem, size = 0x12000, scoped, tag = 'internal scratch']
  %s0 = inlined_call_operand.hbm [shape: f32[2,16], index: 0, kind: input, shape index: {}]
  %s1 = inlined_call_operand.hbm [shape: bf16[16,512], index: 1, kind: input, shape index: {}]
  %s2 = inlined_call_operand.hbm [shape: f32[1,512], index: 2, kind: input, shape index: {}]
  %s3 = inlined_call_operand.hbm [shape: bf16[512,128], index: 3, kind: input, shape index: {}]
  %s4 = inlined_call_operand.hbm [shape: f32[1,128], index: 4, kind: input, shape index: {}]
  %s5 = inlined_call_operand.vmem [shape: f32[2,4,32], index: 5, kind: input, shape index: {}]
  %s6 = inlined_call_operand.vmem [shape: f32[2,4,32], index: 6, kind: input, shape index: {}]
  %s7 = inlined_call_operand.hbm [shape: f32[2,32,128], index: 7, kind: input, shape index: {}]
  %s8 = inlined_call_operand.hbm [shape: f32[2,32,128], index: 8, kind: input, shape index: {}]
  %s9 = inlined_call_operand.vmem [shape: f32[2,128], index: 9, kind: input, shape index: {}]
  %s10 = inlined_call_operand.hbm [shape: f32[2,128], index: 10, kind: output, shape index: {}]
  %s11 = sld [smem:[#allocation0]]
  $region78: #{tpu_custom_call.1} parent=0
    _
  %s13 = ssub.s32 1, %s11
  %s14 = scalar_select 0, %s13, %s11
  $region1: #{tpu_custom_call.1} parent=0
    #allocation2 [shape = 'u8[1024]{0}', space=vmem, size = 0x400, scoped, tag = 'input window, operand 0, single buffered']
    #allocation3 [shape = 's32[1]{0}', space=sflag, size = 0x4, scoped, tag = 'scoped memory for tpu_custom_call.1']
    #allocation4 [shape = 's32[1]{0}', space=sflag, size = 0x4, scoped, tag = 'scoped memory for tpu_custom_call.1']
    #allocation5 [shape = 'u8[16384]{0}', space=vmem, size = 0x4000, scoped, tag = 'input window, operand 1, single buffered']
    #allocation6 [shape = 's32[1]{0}', space=sflag, size = 0x4, scoped, tag = 'scoped memory for tpu_custom_call.1']
    #allocation7 [shape = 'u8[2048]{0}', space=vmem, size = 0x800, scoped, tag = 'input window, operand 2, single buffered']
    #allocation8 [shape = 'u8[131072]{0}', space=vmem, size = 0x20000, scoped, tag = 'input window, operand 3, single buffered']
    #allocation9 [shape = 's32[1]{0}', space=sflag, size = 0x4, scoped, tag = 'scoped memory for tpu_custom_call.1']
    #allocation10 [shape = 'u8[512]{0}', space=vmem, size = 0x400, scoped, tag = 'input window, operand 4, single buffered']
    #allocation11 [shape = 'u8[32768]{0}', space=vmem, size = 0x8000, scoped, tag = 'input window, operand 7, single buffered']
    #allocation12 [shape = 's32[1]{0}', space=sflag, size = 0x4, scoped, tag = 'scoped memory for tpu_custom_call.1']
    #allocation13 [shape = 'u8[32768]{0}', space=vmem, size = 0x8000, scoped, tag = 'input window, operand 8, single buffered']
    #allocation14 [shape = 'u8[1024]{0}', space=vmem, size = 0x400, scoped, tag = 'output window, operand 0, single buffered']
    %15 = vsyncpa [#allocation3], 0
    %16 = vsyncpa [#allocation6], 0
    %17 = vsyncpa [#allocation9], 0
    %18 = vsyncpa [#allocation12], 0
    %19 = vsyncpa [#allocation4], 0
    // Predicated region
    $region2: #{tpu_custom_call.1} parent=1 // pred_check
      _
    $region3: #{tpu_custom_call.1} parent=1 // pred_check_branch
      %21 = sbr.rel (0) target = $region5
    $region4: #{tpu_custom_call.1} parent=1 // pred_region
      %s23 = ssub.s32 32, 32
      %24 = vsyncadd [#allocation3], %s23
      %s26 = sshll.u32 [#allocation2], 4
      %s27 = int_to_ptr.vmem [resolvable:$true] %s26
      %29 = dma.hbm_to_vmem [thread:$0]  %s0, 32, %s27, [#allocation3]
    $region5: #{tpu_custom_call.1} parent=1 // pred_fallthru
      _
    // Predicated region
    $region6: #{tpu_custom_call.1} parent=1 // pred_check
      _
    $region7: #{tpu_custom_call.1} parent=1 // pred_check_branch
      %31 = sbr.rel (0) target = $region9
    $region8: #{tpu_custom_call.1} parent=1 // pred_region
      %s33 = ssub.s32 512, 512
      %34 = vsyncadd [#allocation6], %s33
      %s35 = sshll.u32 [#allocation5], 4
      %s36 = int_to_ptr.vmem [resolvable:$true] %s35
      %41 = dma.hbm_to_vmem [thread:$0]  %s1, 512, %s36, [#allocation6], 256, 256, 16
    $region9: #{tpu_custom_call.1} parent=1 // pred_fallthru
      _
    // Predicated region
    $region10: #{tpu_custom_call.1} parent=1 // pred_check
      _
    $region11: #{tpu_custom_call.1} parent=1 // pred_check_branch
      %43 = sbr.rel (0) target = $region13
    $region12: #{tpu_custom_call.1} parent=1 // pred_region
      %s45 = ssub.s32 64, 64
      %46 = vsyncadd [#allocation6], %s45
      %s48 = sshll.u32 [#allocation7], 4
      %s49 = int_to_ptr.vmem [resolvable:$true] %s48
      %51 = dma.hbm_to_vmem [thread:$0]  %s2, 64, %s49, [#allocation6]
    $region13: #{tpu_custom_call.1} parent=1 // pred_fallthru
      _
    // Predicated region
    $region14: #{tpu_custom_call.1} parent=1 // pred_check
      _
    $region15: #{tpu_custom_call.1} parent=1 // pred_check_branch
      %53 = sbr.rel (0) target = $region17
    $region16: #{tpu_custom_call.1} parent=1 // pred_region
      %s55 = ssub.s32 4096, 4096
      %56 = vsyncadd [#allocation9], %s55
      %s57 = sshll.u32 [#allocation8], 4
      %s58 = int_to_ptr.vmem [resolvable:$true] %s57
      %63 = dma.hbm_to_vmem [thread:$0]  %s3, 4096, %s58, [#allocation9], 64, 64, 4
    $region17: #{tpu_custom_call.1} parent=1 // pred_fallthru
      _
    // Predicated region
    $region18: #{tpu_custom_call.1} parent=1 // pred_check
      _
    $region19: #{tpu_custom_call.1} parent=1 // pred_check_branch
      %65 = sbr.rel (0) target = $region21
    $region20: #{tpu_custom_call.1} parent=1 // pred_region
      %s67 = ssub.s32 16, 16
      %68 = vsyncadd [#allocation9], %s67
      %s70 = sshll.u32 [#allocation10], 4
      %s71 = int_to_ptr.vmem [resolvable:$true] %s70
      %73 = dma.hbm_to_vmem [thread:$0]  %s4, 16, %s71, [#allocation9]
    $region21: #{tpu_custom_call.1} parent=1 // pred_fallthru
      _
    // Predicated region
    $region22: #{tpu_custom_call.1} parent=1 // pred_check
      _
    $region23: #{tpu_custom_call.1} parent=1 // pred_check_branch
      %75 = sbr.rel (0) target = $region25
    $region24: #{tpu_custom_call.1} parent=1 // pred_region
      _
    $region25: #{tpu_custom_call.1} parent=1 // pred_fallthru
      _
    // Predicated region
    $region26: #{tpu_custom_call.1} parent=1 // pred_check
      _
    $region27: #{tpu_custom_call.1} parent=1 // pred_check_branch
      %77 = sbr.rel (0) target = $region29
    $region28: #{tpu_custom_call.1} parent=1 // pred_region
      _
    $region29: #{tpu_custom_call.1} parent=1 // pred_fallthru
      _
    // Predicated region
    $region30: #{tpu_custom_call.1} parent=1 // pred_check
      _
    $region31: #{tpu_custom_call.1} parent=1 // pred_check_branch
      %79 = sbr.rel (0) target = $region33
    $region32: #{tpu_custom_call.1} parent=1 // pred_region
      %s81 = ssub.s32 1024, 1024
      %82 = vsyncadd [#allocation12], %s81
      %s83 = sshll.u32 [#allocation11], 4
      %s84 = int_to_ptr.vmem [resolvable:$true] %s83
      %89 = dma.hbm_to_vmem [thread:$0]  %s7, 1024, %s84, [#allocation12], 128, 128, 8
    $region33: #{tpu_custom_call.1} parent=1 // pred_fallthru
      _
    // Predicated region
    $region34: #{tpu_custom_call.1} parent=1 // pred_check
      _
    $region35: #{tpu_custom_call.1} parent=1 // pred_check_branch
      %91 = sbr.rel (0) target = $region37
    $region36: #{tpu_custom_call.1} parent=1 // pred_region
      %s93 = ssub.s32 1024, 1024
      %94 = vsyncadd [#allocation12], %s93
      %s95 = sshll.u32 [#allocation13], 4
      %s96 = int_to_ptr.vmem [resolvable:$true] %s95
      %101 = dma.hbm_to_vmem [thread:$0]  %s8, 1024, %s96, [#allocation12], 128, 128, 8
    $region37: #{tpu_custom_call.1} parent=1 // pred_fallthru
      _
    // Predicated region
    $region38: #{tpu_custom_call.1} parent=1 // pred_check
      _
    $region39: #{tpu_custom_call.1} parent=1 // pred_check_branch
      %103 = sbr.rel (0) target = $region41
    $region40: #{tpu_custom_call.1} parent=1 // pred_region
      _
    $region41: #{tpu_custom_call.1} parent=1 // pred_fallthru
      _
    // Predicated region
    $region42: #{tpu_custom_call.1} parent=1 // pred_check
      _
    $region43: #{tpu_custom_call.1} parent=1 // pred_check_branch
      %105 = sbr.rel (0) target = $region45
    $region44: #{tpu_custom_call.1} parent=1 // pred_region
      %106 = dma.done [#allocation3], 32
    $region45: #{tpu_custom_call.1} parent=1 // pred_fallthru
      _
    // Predicated region
    $region46: #{tpu_custom_call.1} parent=1 // pred_check
      _
    $region47: #{tpu_custom_call.1} parent=1 // pred_check_branch
      %108 = sbr.rel (0) target = $region49
    $region48: #{tpu_custom_call.1} parent=1 // pred_region
      %109 = dma.done [#allocation6], 512
    $region49: #{tpu_custom_call.1} parent=1 // pred_fallthru
      _
    // Predicated region
    $region50: #{tpu_custom_call.1} parent=1 // pred_check
      _
    $region51: #{tpu_custom_call.1} parent=1 // pred_check_branch
      %111 = sbr.rel (0) target = $region53
    $region52: #{tpu_custom_call.1} parent=1 // pred_region
      %112 = dma.done [#allocation6], 64
    $region53: #{tpu_custom_call.1} parent=1 // pred_fallthru
      _
    // Predicated region
    $region54: #{tpu_custom_call.1} parent=1 // pred_check
      _
    $region55: #{tpu_custom_call.1} parent=1 // pred_check_branch
      %114 = sbr.rel (0) target = $region57
    $region56: #{tpu_custom_call.1} parent=1 // pred_region
      %115 = dma.done [#allocation9], 4096
    $region57: #{tpu_custom_call.1} parent=1 // pred_fallthru
      _
    // Predicated region
    $region58: #{tpu_custom_call.1} parent=1 // pred_check
      _
    $region59: #{tpu_custom_call.1} parent=1 // pred_check_branch
      %117 = sbr.rel (0) target = $region61
    $region60: #{tpu_custom_call.1} parent=1 // pred_region
      %118 = dma.done [#allocation9], 16
    $region61: #{tpu_custom_call.1} parent=1 // pred_fallthru
      _
    // Predicated region
    $region62: #{tpu_custom_call.1} parent=1 // pred_check
      _
    $region63: #{tpu_custom_call.1} parent=1 // pred_check_branch
      %120 = sbr.rel (0) target = $region65
    $region64: #{tpu_custom_call.1} parent=1 // pred_region
      %121 = dma.done [#allocation12], 1024
    $region65: #{tpu_custom_call.1} parent=1 // pred_fallthru
      _
    // Predicated region
    $region66: #{tpu_custom_call.1} parent=1 // pred_check
      _
    $region67: #{tpu_custom_call.1} parent=1 // pred_check_branch
      %123 = sbr.rel (0) target = $region69
    $region68: #{tpu_custom_call.1} parent=1 // pred_region
      %124 = dma.done [#allocation12], 1024
    $region69: #{tpu_custom_call.1} parent=1 // pred_fallthru
      _
    %v126 = vld [vmem:[#allocation2] sm:$0x3]
    %v127 = vpack.c.bf16 %v126, %v126
    %v128 = vld [vmem:[#allocation5] sm:$0xff]
    %v129 = vld [vmem:[#allocation5 + $0x8] sm:$0xff]
    %v130 = vld [vmem:[#allocation5 + $0x10] sm:$0xff]
    %v131 = vld [vmem:[#allocation5 + $0x18] sm:$0xff]
    %v132 = vld [vmem:[#allocation7] sm:$0xf]
    %v134 = vlaneseq
    %v135 = vshrl.u32 %v134, 7
    %v136 = vsub.s32 0, %v135
    %v137 = vrot.slane %v132, %v136
    %v138 = vlaneseq
    %v139 = vshrl.u32 %v138, 7
    %v140 = vsub.s32 1, %v139
    %v141 = vrot.slane %v132, %v140
    %v142 = vlaneseq
    %v143 = vshrl.u32 %v142, 7
    %v144 = vsub.s32 2, %v143
    %v145 = vrot.slane %v132, %v144
    %v146 = vlaneseq
    %v147 = vshrl.u32 %v146, 7
    %v148 = vsub.s32 3, %v147
    %v149 = vrot.slane %v132, %v148
    %v158 = vunpack.c.l.b16 %v128
    %v159 = vunpack.c.h.b16 %v128
    %v160 = vunpack.c.l.b16 %v129
    %v161 = vunpack.c.h.b16 %v129
    %v162 = vunpack.c.l.b16 %v130
    %v163 = vunpack.c.h.b16 %v130
    %v164 = vunpack.c.l.b16 %v131
    %v165 = vunpack.c.h.b16 %v131
    %v166 = vpack.c.b16 %v162, %v158
    %v167 = vpack.c.b16 %v163, %v159
    %v168 = vpack.c.b16 %v164, %v160
    %v169 = vpack.c.b16 %v165, %v161
    %vm174 = vcmask 130048
    %v176 = vsel %vm174, %v127, 0
    %178 = vmatprep.subr.bf16.mxu0 %v167
    %179 = vmatpush1.bf16.msra.mxu0 %v166
    %180 = vmatprep.subr.bf16.mxu0 0
    %181 = vmatpush1.bf16.msra.mxu0 0
    %182 = vmatprep.subr.bf16.mxu0 0
    %183 = vmatpush1.bf16.msra.mxu0 0
    %184 = vmatprep.subr.bf16.mxu0 0
    %185 = vmatpush1.bf16.msra.mxu0 0
    %186 = vmatprep.subr.bf16.mxu0 0
    %187 = vmatpush1.bf16.msra.mxu0 0
    %188 = vmatprep.subr.bf16.mxu0 0
    %189 = vmatpush1.bf16.msra.mxu0 0
    %190 = vmatprep.subr.bf16.mxu0 0
    %191 = vmatpush1.bf16.msra.mxu0 0
    %192 = vmatprep.subr.bf16.mxu0 0
    %193 = vmatpush1.bf16.msra.mxu0 0
    %194 = vmatprep.subr.bf16.mxu0 0
    %195 = vmatpush1.bf16.msra.mxu0 0
    %196 = vmatprep.subr.bf16.mxu0 0
    %197 = vmatpush1.bf16.msra.mxu0 0
    %198 = vmatprep.subr.bf16.mxu0 0
    %199 = vmatpush1.bf16.msra.mxu0 0
    %200 = vmatprep.subr.bf16.mxu0 0
    %201 = vmatpush1.bf16.msra.mxu0 0
    %202 = vmatprep.subr.bf16.mxu0 0
    %203 = vmatpush1.bf16.msra.mxu0 0
    %204 = vmatprep.subr.bf16.mxu0 0
    %205 = vmatpush1.bf16.msra.mxu0 0
    %206 = vmatprep.subr.bf16.mxu0 0
    %207 = vmatpush1.bf16.msra.mxu0 0
    %208 = vmatprep.subr.bf16.mxu0 0
    %209 = vmatpush1.bf16.msra.mxu0 0
    %210 = vmatprep.mubr.bf16.mxu0 0
    %211 = vmatmul.mubr.bf16.gmra.mrb[0].mxu0 %v176
    %v212 = vpop.f32.mrb[0].mxu0
    %v213 = vadd.f32 %v137, %v212
    %v214 = vpop.f32.mrb[0].mxu0
    %v215 = vadd.f32 %v141, %v214
    %v216 = vpop.f32.mrb[0].mxu0
    %v217 = vpop.f32.mrb[0].mxu0
    %218 = vdwg.mxu0
    %219 = vmatprep.subr.bf16.mxu0 %v169
    %220 = vmatpush1.bf16.msra.mxu0 %v168
    %221 = vmatprep.subr.bf16.mxu0 0
    %222 = vmatpush1.bf16.msra.mxu0 0
    %223 = vmatprep.subr.bf16.mxu0 0
    %224 = vmatpush1.bf16.msra.mxu0 0
    %225 = vmatprep.subr.bf16.mxu0 0
    %226 = vmatpush1.bf16.msra.mxu0 0
    %227 = vmatprep.subr.bf16.mxu0 0
    %228 = vmatpush1.bf16.msra.mxu0 0
    %229 = vmatprep.subr.bf16.mxu0 0
    %230 = vmatpush1.bf16.msra.mxu0 0
    %231 = vmatprep.subr.bf16.mxu0 0
    %232 = vmatpush1.bf16.msra.mxu0 0
    %233 = vmatprep.subr.bf16.mxu0 0
    %234 = vmatpush1.bf16.msra.mxu0 0
    %235 = vmatprep.subr.bf16.mxu0 0
    %236 = vmatpush1.bf16.msra.mxu0 0
    %237 = vmatprep.subr.bf16.mxu0 0
    %238 = vmatpush1.bf16.msra.mxu0 0
    %239 = vmatprep.subr.bf16.mxu0 0
    %240 = vmatpush1.bf16.msra.mxu0 0
    %241 = vmatprep.subr.bf16.mxu0 0
    %242 = vmatpush1.bf16.msra.mxu0 0
    %243 = vmatprep.subr.bf16.mxu0 0
    %244 = vmatpush1.bf16.msra.mxu0 0
    %245 = vmatprep.subr.bf16.mxu0 0
    %246 = vmatpush1.bf16.msra.mxu0 0
    %247 = vmatprep.subr.bf16.mxu0 0
    %248 = vmatpush1.bf16.msra.mxu0 0
    %249 = vmatprep.subr.bf16.mxu0 0
    %250 = vmatpush1.bf16.msra.mxu0 0
    %251 = vmatprep.mubr.bf16.mxu0 0
    %252 = vmatmul.mubr.bf16.gmra.mrb[0].mxu0 %v176
    %v253 = vpop.f32.mrb[0].mxu0
    %v254 = vadd.f32 %v145, %v253
    %v255 = vpop.f32.mrb[0].mxu0
    %v256 = vadd.f32 %v149, %v255
    %v257 = vpop.f32.mrb[0].mxu0
    %v258 = vpop.f32.mrb[0].mxu0
    %259 = vdwg.mxu0
    %v260 = vmax.f32 %v213, 0.0
    %v261 = vmax.f32 %v215, 0.0
    %v262 = vmax.f32 %v254, 0.0
    %v263 = vmax.f32 %v256, 0.0
    %v264 = vpack.c.bf16 %v260, %v260
    %v265 = vpack.c.bf16 %v261, %v261
    %v266 = vpack.c.bf16 %v262, %v262
    %v267 = vpack.c.bf16 %v263, %v263
    %v268 = vld [vmem:[#allocation8] sm:$0xf]
    %v269 = vld [vmem:[#allocation8 + $0x4] sm:$0xf]
    %v270 = vld [vmem:[#allocation8 + $0x8] sm:$0xf]
    %v271 = vld [vmem:[#allocation8 + $0xc] sm:$0xf]
    %v272 = vld [vmem:[#allocation8 + $0x10] sm:$0xf]
    %v273 = vld [vmem:[#allocation8 + $0x14] sm:$0xf]
    %v274 = vld [vmem:[#allocation8 + $0x18] sm:$0xf]
    %v275 = vld [vmem:[#allocation8 + $0x1c] sm:$0xf]
    %v276 = vld [vmem:[#allocation8 + $0x20] sm:$0xf]
    %v277 = vld [vmem:[#allocation8 + $0x24] sm:$0xf]
    %v278 = vld [vmem:[#allocation8 + $0x28] sm:$0xf]
    %v279 = vld [vmem:[#allocation8 + $0x2c] sm:$0xf]
    %v280 = vld [vmem:[#allocation8 + $0x30] sm:$0xf]
    %v281 = vld [vmem:[#allocation8 + $0x34] sm:$0xf]
    %v282 = vld [vmem:[#allocation8 + $0x38] sm:$0xf]
    %v283 = vld [vmem:[#allocation8 + $0x3c] sm:$0xf]
    %v284 = vld [vmem:[#allocation8 + $0x40] sm:$0xf]
    %v285 = vld [vmem:[#allocation8 + $0x44] sm:$0xf]
    %v286 = vld [vmem:[#allocation8 + $0x48] sm:$0xf]
    %v287 = vld [vmem:[#allocation8 + $0x4c] sm:$0xf]
    %v288 = vld [vmem:[#allocation8 + $0x50] sm:$0xf]
    %v289 = vld [vmem:[#allocation8 + $0x54] sm:$0xf]
    %v290 = vld [vmem:[#allocation8 + $0x58] sm:$0xf]
    %v291 = vld [vmem:[#allocation8 + $0x5c] sm:$0xf]
    %v292 = vld [vmem:[#allocation8 + $0x60] sm:$0xf]
    %v293 = vld [vmem:[#allocation8 + $0x64] sm:$0xf]
    %v294 = vld [vmem:[#allocation8 + $0x68] sm:$0xf]
    %v295 = vld [vmem:[#allocation8 + $0x6c] sm:$0xf]
    %v296 = vld [vmem:[#allocation8 + $0x70] sm:$0xf]
    %v297 = vld [vmem:[#allocation8 + $0x74] sm:$0xf]
    %v298 = vld [vmem:[#allocation8 + $0x78] sm:$0xf]
    %v299 = vld [vmem:[#allocation8 + $0x7c] sm:$0xf]
    %v300 = vld [vmem:[#allocation8 + $0x80] sm:$0xf]
    %v301 = vld [vmem:[#allocation8 + $0x84] sm:$0xf]
    %v302 = vld [vmem:[#allocation8 + $0x88] sm:$0xf]
    %v303 = vld [vmem:[#allocation8 + $0x8c] sm:$0xf]
    %v304 = vld [vmem:[#allocation8 + $0x90] sm:$0xf]
    %v305 = vld [vmem:[#allocation8 + $0x94] sm:$0xf]
    %v306 = vld [vmem:[#allocation8 + $0x98] sm:$0xf]
    %v307 = vld [vmem:[#allocation8 + $0x9c] sm:$0xf]
    %v308 = vld [vmem:[#allocation8 + $0xa0] sm:$0xf]
    %v309 = vld [vmem:[#allocation8 + $0xa4] sm:$0xf]
    %v310 = vld [vmem:[#allocation8 + $0xa8] sm:$0xf]
    %v311 = vld [vmem:[#allocation8 + $0xac] sm:$0xf]
    %v312 = vld [vmem:[#allocation8 + $0xb0] sm:$0xf]
    %v313 = vld [vmem:[#allocation8 + $0xb4] sm:$0xf]
    %v314 = vld [vmem:[#allocation8 + $0xb8] sm:$0xf]
    %v315 = vld [vmem:[#allocation8 + $0xbc] sm:$0xf]
    %v316 = vld [vmem:[#allocation8 + $0xc0] sm:$0xf]
    %v317 = vld [vmem:[#allocation8 + $0xc4] sm:$0xf]
    %v318 = vld [vmem:[#allocation8 + $0xc8] sm:$0xf]
    %v319 = vld [vmem:[#allocation8 + $0xcc] sm:$0xf]
    %v320 = vld [vmem:[#allocation8 + $0xd0] sm:$0xf]
    %v321 = vld [vmem:[#allocation8 + $0xd4] sm:$0xf]
    %v322 = vld [vmem:[#allocation8 + $0xd8] sm:$0xf]
    %v323 = vld [vmem:[#allocation8 + $0xdc] sm:$0xf]
    %v324 = vld [vmem:[#allocation8 + $0xe0] sm:$0xf]
    %v325 = vld [vmem:[#allocation8 + $0xe4] sm:$0xf]
    %v326 = vld [vmem:[#allocation8 + $0xe8] sm:$0xf]
    %v327 = vld [vmem:[#allocation8 + $0xec] sm:$0xf]
    %v328 = vld [vmem:[#allocation8 + $0xf0] sm:$0xf]
    %v329 = vld [vmem:[#allocation8 + $0xf4] sm:$0xf]
    %v330 = vld [vmem:[#allocation8 + $0xf8] sm:$0xf]
    %v331 = vld [vmem:[#allocation8 + $0xfc] sm:$0xf]
    %v332 = vld [vmem:[#allocation10] sm:$0x1]
    %v334 = vlaneseq
    %v335 = vshrl.u32 %v334, 7
    %v336 = vsub.s32 0, %v335
    %v337 = vrot.slane %v332, %v336
    %v403 = vunpack.c.l.b16 %v268
    %v404 = vunpack.c.l.b16 %v269
    %v405 = vunpack.c.l.b16 %v270
    %v406 = vunpack.c.l.b16 %v271
    %v407 = vunpack.c.l.b16 %v272
    %v408 = vunpack.c.l.b16 %v273
    %v409 = vunpack.c.l.b16 %v274
    %v410 = vunpack.c.l.b16 %v275
    %v411 = vunpack.c.l.b16 %v276
    %v412 = vunpack.c.l.b16 %v277
    %v413 = vunpack.c.l.b16 %v278
    %v414 = vunpack.c.l.b16 %v279
    %v415 = vunpack.c.l.b16 %v280
    %v416 = vunpack.c.l.b16 %v281
    %v417 = vunpack.c.l.b16 %v282
    %v418 = vunpack.c.l.b16 %v283
    %v419 = vunpack.c.l.b16 %v284
    %v420 = vunpack.c.l.b16 %v285
    %v421 = vunpack.c.l.b16 %v286
    %v422 = vunpack.c.l.b16 %v287
    %v423 = vunpack.c.l.b16 %v288
    %v424 = vunpack.c.l.b16 %v289
    %v425 = vunpack.c.l.b16 %v290
    %v426 = vunpack.c.l.b16 %v291
    %v427 = vunpack.c.l.b16 %v292
    %v428 = vunpack.c.l.b16 %v293
    %v429 = vunpack.c.l.b16 %v294
    %v430 = vunpack.c.l.b16 %v295
    %v431 = vunpack.c.l.b16 %v296
    %v432 = vunpack.c.l.b16 %v297
    %v433 = vunpack.c.l.b16 %v298
    %v434 = vunpack.c.l.b16 %v299
    %v435 = vunpack.c.l.b16 %v300
    %v436 = vunpack.c.l.b16 %v301
    %v437 = vunpack.c.l.b16 %v302
    %v438 = vunpack.c.l.b16 %v303
    %v439 = vunpack.c.l.b16 %v304
    %v440 = vunpack.c.l.b16 %v305
    %v441 = vunpack.c.l.b16 %v306
    %v442 = vunpack.c.l.b16 %v307
    %v443 = vunpack.c.l.b16 %v308
    %v444 = vunpack.c.l.b16 %v309
    %v445 = vunpack.c.l.b16 %v310
    %v446 = vunpack.c.l.b16 %v311
    %v447 = vunpack.c.l.b16 %v312
    %v448 = vunpack.c.l.b16 %v313
    %v449 = vunpack.c.l.b16 %v314
    %v450 = vunpack.c.l.b16 %v315
    %v451 = vunpack.c.l.b16 %v316
    %v452 = vunpack.c.l.b16 %v317
    %v453 = vunpack.c.l.b16 %v318
    %v454 = vunpack.c.l.b16 %v319
    %v455 = vunpack.c.l.b16 %v320
    %v456 = vunpack.c.l.b16 %v321
    %v457 = vunpack.c.l.b16 %v322
    %v458 = vunpack.c.l.b16 %v323
    %v459 = vunpack.c.l.b16 %v324
    %v460 = vunpack.c.l.b16 %v325
    %v461 = vunpack.c.l.b16 %v326
    %v462 = vunpack.c.l.b16 %v327
    %v463 = vunpack.c.l.b16 %v328
    %v464 = vunpack.c.l.b16 %v329
    %v465 = vunpack.c.l.b16 %v330
    %v466 = vunpack.c.l.b16 %v331
    %v467 = vpack.c.b16 %v404, %v403
    %v468 = vpack.c.b16 %v406, %v405
    %v469 = vpack.c.b16 %v408, %v407
    %v470 = vpack.c.b16 %v410, %v409
    %v471 = vpack.c.b16 %v412, %v411
    %v472 = vpack.c.b16 %v414, %v413
    %v473 = vpack.c.b16 %v416, %v415
    %v474 = vpack.c.b16 %v418, %v417
    %v475 = vpack.c.b16 %v420, %v419
    %v476 = vpack.c.b16 %v422, %v421
    %v477 = vpack.c.b16 %v424, %v423
    %v478 = vpack.c.b16 %v426, %v425
    %v479 = vpack.c.b16 %v428, %v427
    %v480 = vpack.c.b16 %v430, %v429
    %v481 = vpack.c.b16 %v432, %v431
    %v482 = vpack.c.b16 %v434, %v433
    %v483 = vpack.c.b16 %v436, %v435
    %v484 = vpack.c.b16 %v438, %v437
    %v485 = vpack.c.b16 %v440, %v439
    %v486 = vpack.c.b16 %v442, %v441
    %v487 = vpack.c.b16 %v444, %v443
    %v488 = vpack.c.b16 %v446, %v445
    %v489 = vpack.c.b16 %v448, %v447
    %v490 = vpack.c.b16 %v450, %v449
    %v491 = vpack.c.b16 %v452, %v451
    %v492 = vpack.c.b16 %v454, %v453
    %v493 = vpack.c.b16 %v456, %v455
    %v494 = vpack.c.b16 %v458, %v457
    %v495 = vpack.c.b16 %v460, %v459
    %v496 = vpack.c.b16 %v462, %v461
    %v497 = vpack.c.b16 %v464, %v463
    %v498 = vpack.c.b16 %v466, %v465
    %531 = vmatprep.subr.bf16.mxu0 0
    %532 = vmatpush1.bf16.msra.mxu0 %v467
    %533 = vmatprep.subr.bf16.mxu0 0
    %534 = vmatpush1.bf16.msra.mxu0 %v468
    %535 = vmatprep.subr.bf16.mxu0 0
    %536 = vmatpush1.bf16.msra.mxu0 %v469
    %537 = vmatprep.subr.bf16.mxu0 0
    %538 = vmatpush1.bf16.msra.mxu0 %v470
    %539 = vmatprep.subr.bf16.mxu0 0
    %540 = vmatpush1.bf16.msra.mxu0 %v471
    %541 = vmatprep.subr.bf16.mxu0 0
    %542 = vmatpush1.bf16.msra.mxu0 %v472
    %543 = vmatprep.subr.bf16.mxu0 0
    %544 = vmatpush1.bf16.msra.mxu0 %v473
    %545 = vmatprep.subr.bf16.mxu0 0
    %546 = vmatpush1.bf16.msra.mxu0 %v474
    %547 = vmatprep.subr.bf16.mxu0 0
    %548 = vmatpush1.bf16.msra.mxu0 %v475
    %549 = vmatprep.subr.bf16.mxu0 0
    %550 = vmatpush1.bf16.msra.mxu0 %v476
    %551 = vmatprep.subr.bf16.mxu0 0
    %552 = vmatpush1.bf16.msra.mxu0 %v477
    %553 = vmatprep.subr.bf16.mxu0 0
    %554 = vmatpush1.bf16.msra.mxu0 %v478
    %555 = vmatprep.subr.bf16.mxu0 0
    %556 = vmatpush1.bf16.msra.mxu0 %v479
    %557 = vmatprep.subr.bf16.mxu0 0
    %558 = vmatpush1.bf16.msra.mxu0 %v480
    %559 = vmatprep.subr.bf16.mxu0 0
    %560 = vmatpush1.bf16.msra.mxu0 %v481
    %561 = vmatprep.subr.bf16.mxu0 0
    %562 = vmatpush1.bf16.msra.mxu0 %v482
    %563 = vmatprep.mubr.bf16.mxu0 %v265
    %564 = vmatmul.mubr.bf16.gmra.mrb[0].mxu0 %v264
    %v565 = vpop.f32.mrb[0].mxu0
    %v566 = vadd.f32 %v337, %v565
    %v567 = vpop.f32.mrb[0].mxu0
    %v568 = vpop.f32.mrb[0].mxu0
    %v569 = vpop.f32.mrb[0].mxu0
    %570 = vdwg.mxu0
    %571 = vmatprep.subr.bf16.mxu0 0
    %572 = vmatpush1.bf16.msra.mxu0 %v483
    %573 = vmatprep.subr.bf16.mxu0 0
    %574 = vmatpush1.bf16.msra.mxu0 %v484
    %575 = vmatprep.subr.bf16.mxu0 0
    %576 = vmatpush1.bf16.msra.mxu0 %v485
    %577 = vmatprep.subr.bf16.mxu0 0
    %578 = vmatpush1.bf16.msra.mxu0 %v486
    %579 = vmatprep.subr.bf16.mxu0 0
    %580 = vmatpush1.bf16.msra.mxu0 %v487
    %581 = vmatprep.subr.bf16.mxu0 0
    %582 = vmatpush1.bf16.msra.mxu0 %v488
    %583 = vmatprep.subr.bf16.mxu0 0
    %584 = vmatpush1.bf16.msra.mxu0 %v489
    %585 = vmatprep.subr.bf16.mxu0 0
    %586 = vmatpush1.bf16.msra.mxu0 %v490
    %587 = vmatprep.subr.bf16.mxu0 0
    %588 = vmatpush1.bf16.msra.mxu0 %v491
    %589 = vmatprep.subr.bf16.mxu0 0
    %590 = vmatpush1.bf16.msra.mxu0 %v492
    %591 = vmatprep.subr.bf16.mxu0 0
    %592 = vmatpush1.bf16.msra.mxu0 %v493
    %593 = vmatprep.subr.bf16.mxu0 0
    %594 = vmatpush1.bf16.msra.mxu0 %v494
    %595 = vmatprep.subr.bf16.mxu0 0
    %596 = vmatpush1.bf16.msra.mxu0 %v495
    %597 = vmatprep.subr.bf16.mxu0 0
    %598 = vmatpush1.bf16.msra.mxu0 %v496
    %599 = vmatprep.subr.bf16.mxu0 0
    %600 = vmatpush1.bf16.msra.mxu0 %v497
    %601 = vmatprep.subr.bf16.mxu0 0
    %602 = vmatpush1.bf16.msra.mxu0 %v498
    %603 = vmatprep.mubr.bf16.mxu0 %v267
    %604 = vmatmul.mubr.bf16.gmra.mrb[0].mxu0 %v266
    %v605 = vpop.f32.mrb[0].mxu0
    %v606 = vadd.f32 %v566, %v605
    %v607 = vpop.f32.mrb[0].mxu0
    %v608 = vpop.f32.mrb[0].mxu0
    %v609 = vpop.f32.mrb[0].mxu0
    %610 = vdwg.mxu0
    %v611 = vxor.u32 %v606, 2147483648
    %v612 = vmul.f32 %v611, 1.442695
    %v613 = vpow.pop %v612
    %v614 = vadd.f32 %v613, 1.0
    %v615 = vrcp.pop %v614
    %v616 = vmul.f32 1.0, %v615
    %v618 = vrot.slane %v616, 7
    %619 = vrot.lane.b32.xlu0 %v618, 96
    %v620 = vpop.permute.xlu0 %619
    %v622 = vrot.slane %v616, 6
    %623 = vrot.lane.b32.xlu0 %v622, 64
    %v624 = vpop.permute.xlu0 %623
    %v626 = vrot.slane %v616, 5
    %627 = vrot.lane.b32.xlu0 %v626, 32
    %v628 = vpop.permute.xlu0 %627
    %v631 = vrot.slane %v616, 4
    %632 = vrot.lane.b32.xlu0 %v631, 96
    %v633 = vpop.permute.xlu0 %632
    %v635 = vrot.slane %v616, 3
    %636 = vrot.lane.b32.xlu0 %v635, 64
    %v637 = vpop.permute.xlu0 %636
    %v639 = vrot.slane %v616, 2
    %640 = vrot.lane.b32.xlu0 %v639, 32
    %v641 = vpop.permute.xlu0 %640
    %vm643 = vcmask 1040384
    %v644 = vsel %vm643, %v616, %v620
    %vm645 = vcmask 1041408
    %v646 = vsel %vm645, %v644, %v624
    %vm647 = vcmask 1042432
    %v648 = vsel %vm647, %v646, %v628
    %vm649 = vcmask 1043456
    %v650 = vsel %vm649, %v648, %v626
    %vm651 = vcmask 1044480
    %v652 = vsel %vm651, %v650, %v633
    %vm653 = vcmask 1045504
    %v654 = vsel %vm653, %v652, %v637
    %vm655 = vcmask 1046528
    %v656 = vsel %vm655, %v654, %v641
    %v657 = vld [vmem:[#allocation11] sm:$0xff]
    %v658 = vld [vmem:[#allocation11 + $0x8] sm:$0xff]
    %v659 = vld [vmem:[#allocation11 + $0x10] sm:$0xff]
    %v660 = vld [vmem:[#allocation11 + $0x18] sm:$0xff]
    %v661 = vld [vmem:[#allocation13] sm:$0xff]
    %v662 = vld [vmem:[#allocation13 + $0x8] sm:$0xff]
    %v663 = vld [vmem:[#allocation13 + $0x10] sm:$0xff]
    %v664 = vld [vmem:[#allocation13 + $0x18] sm:$0xff]
    %v665 = vld [vmem:[%s9] sm:$0x1]
    %v666 = vlaneseq
    %v667 = vshrl.u32 %v666, 7
    %v668 = vsub.s32 0, %v667
    %v669 = vrot.slane %v665, %v668
    %vm670 = vcmask 261120
    %v672 = vsel %vm670, %v656, 0
    %674 = vmatprep.subr.mxu0 0.0
    %675 = vmatpush1.msra.mxu0 %v657
    %676 = vmatprep.subr.mxu0 0.0
    %677 = vmatpush1.msra.mxu0 %v658
    %678 = vmatprep.subr.mxu0 0.0
    %679 = vmatpush1.msra.mxu0 %v659
    %680 = vmatprep.subr.mxu0 0.0
    %681 = vmatpush1.msra.mxu0 %v660
    %682 = vmatprep.subr.mxu0 0.0
    %683 = vmatpush1.msra.mxu0 0.0
    %684 = vmatprep.subr.mxu0 0.0
    %685 = vmatpush1.msra.mxu0 0.0
    %686 = vmatprep.subr.mxu0 0.0
    %687 = vmatpush1.msra.mxu0 0.0
    %688 = vmatprep.subr.mxu0 0.0
    %689 = vmatpush1.msra.mxu0 0.0
    %690 = vmatprep.subr.mxu0 0.0
    %691 = vmatpush1.msra.mxu0 0.0
    %692 = vmatprep.subr.mxu0 0.0
    %693 = vmatpush1.msra.mxu0 0.0
    %694 = vmatprep.subr.mxu0 0.0
    %695 = vmatpush1.msra.mxu0 0.0
    %696 = vmatprep.subr.mxu0 0.0
    %697 = vmatpush1.msra.mxu0 0.0
    %698 = vmatprep.subr.mxu0 0.0
    %699 = vmatpush1.msra.mxu0 0.0
    %700 = vmatprep.subr.mxu0 0.0
    %701 = vmatpush1.msra.mxu0 0.0
    %702 = vmatprep.subr.mxu0 0.0
    %703 = vmatpush1.msra.mxu0 0.0
    %704 = vmatprep.subr.mxu0 0.0
    %705 = vmatpush1.msra.mxu0 0.0
    %706 = vmatprep.subr.mxu0 0.0
    %707 = vmatpush1.msra.mxu0 0.0
    %708 = vmatprep.subr.mxu0 0.0
    %709 = vmatpush1.msra.mxu0 0.0
    %710 = vmatprep.subr.mxu0 0.0
    %711 = vmatpush1.msra.mxu0 0.0
    %712 = vmatprep.subr.mxu0 0.0
    %713 = vmatpush1.msra.mxu0 0.0
    %714 = vmatprep.subr.mxu0 0.0
    %715 = vmatpush1.msra.mxu0 0.0
    %716 = vmatprep.subr.mxu0 0.0
    %717 = vmatpush1.msra.mxu0 0.0
    %718 = vmatprep.subr.mxu0 0.0
    %719 = vmatpush1.msra.mxu0 0.0
    %720 = vmatprep.subr.mxu0 0.0
    %721 = vmatpush1.msra.mxu0 0.0
    %722 = vmatprep.subr.mxu0 0.0
    %723 = vmatpush1.msra.mxu0 0.0
    %724 = vmatprep.subr.mxu0 0.0
    %725 = vmatpush1.msra.mxu0 0.0
    %726 = vmatprep.subr.mxu0 0.0
    %727 = vmatpush1.msra.mxu0 0.0
    %728 = vmatprep.subr.mxu0 0.0
    %729 = vmatpush1.msra.mxu0 0.0
    %730 = vmatprep.subr.mxu0 0.0
    %731 = vmatpush1.msra.mxu0 0.0
    %732 = vmatprep.subr.mxu0 0.0
    %733 = vmatpush1.msra.mxu0 0.0
    %734 = vmatprep.subr.mxu0 0.0
    %735 = vmatpush1.msra.mxu0 0.0
    %736 = vmatprep.subr.mxu0 0.0
    %737 = vmatpush1.msra.mxu0 0.0
    %738 = vmatprep.mubr.f32.mxu0 0.0
    %739 = vmatmul.mubr.f32.gmra.mrb[0].mxu0 %v672
    %v740 = vpop.f32.mrb[0].mxu0
    %v741 = vadd.f32 %v669, %v740
    %v742 = vpop.f32.mrb[0].mxu0
    %743 = vdwg.mxu0
    %v744 = vld [vmem:[%s5] sm:$0xf]
    %v745 = vld [vmem:[%s6] sm:$0xf]
    %v747 = vsel %vm670, %v744, 0
    %749 = vmatprep.subr.mxu0 0.0
    %750 = vmatpush1.msra.mxu0 %v661
    %751 = vmatprep.subr.mxu0 0.0
    %752 = vmatpush1.msra.mxu0 %v662
    %753 = vmatprep.subr.mxu0 0.0
    %754 = vmatpush1.msra.mxu0 %v663
    %755 = vmatprep.subr.mxu0 0.0
    %756 = vmatpush1.msra.mxu0 %v664
    %757 = vmatprep.subr.mxu0 0.0
    %758 = vmatpush1.msra.mxu0 0.0
    %759 = vmatprep.subr.mxu0 0.0
    %760 = vmatpush1.msra.mxu0 0.0
    %761 = vmatprep.subr.mxu0 0.0
    %762 = vmatpush1.msra.mxu0 0.0
    %763 = vmatprep.subr.mxu0 0.0
    %764 = vmatpush1.msra.mxu0 0.0
    %765 = vmatprep.subr.mxu0 0.0
    %766 = vmatpush1.msra.mxu0 0.0
    %767 = vmatprep.subr.mxu0 0.0
    %768 = vmatpush1.msra.mxu0 0.0
    %769 = vmatprep.subr.mxu0 0.0
    %770 = vmatpush1.msra.mxu0 0.0
    %771 = vmatprep.subr.mxu0 0.0
    %772 = vmatpush1.msra.mxu0 0.0
    %773 = vmatprep.subr.mxu0 0.0
    %774 = vmatpush1.msra.mxu0 0.0
    %775 = vmatprep.subr.mxu0 0.0
    %776 = vmatpush1.msra.mxu0 0.0
    %777 = vmatprep.subr.mxu0 0.0
    %778 = vmatpush1.msra.mxu0 0.0
    %779 = vmatprep.subr.mxu0 0.0
    %780 = vmatpush1.msra.mxu0 0.0
    %781 = vmatprep.subr.mxu0 0.0
    %782 = vmatpush1.msra.mxu0 0.0
    %783 = vmatprep.subr.mxu0 0.0
    %784 = vmatpush1.msra.mxu0 0.0
    %785 = vmatprep.subr.mxu0 0.0
    %786 = vmatpush1.msra.mxu0 0.0
    %787 = vmatprep.subr.mxu0 0.0
    %788 = vmatpush1.msra.mxu0 0.0
    %789 = vmatprep.subr.mxu0 0.0
    %790 = vmatpush1.msra.mxu0 0.0
    %791 = vmatprep.subr.mxu0 0.0
    %792 = vmatpush1.msra.mxu0 0.0
    %793 = vmatprep.subr.mxu0 0.0
    %794 = vmatpush1.msra.mxu0 0.0
    %795 = vmatprep.subr.mxu0 0.0
    %796 = vmatpush1.msra.mxu0 0.0
    %797 = vmatprep.subr.mxu0 0.0
    %798 = vmatpush1.msra.mxu0 0.0
    %799 = vmatprep.subr.mxu0 0.0
    %800 = vmatpush1.msra.mxu0 0.0
    %801 = vmatprep.subr.mxu0 0.0
    %802 = vmatpush1.msra.mxu0 0.0
    %803 = vmatprep.subr.mxu0 0.0
    %804 = vmatpush1.msra.mxu0 0.0
    %805 = vmatprep.subr.mxu0 0.0
    %806 = vmatpush1.msra.mxu0 0.0
    %807 = vmatprep.subr.mxu0 0.0
    %808 = vmatpush1.msra.mxu0 0.0
    %809 = vmatprep.subr.mxu0 0.0
    %810 = vmatpush1.msra.mxu0 0.0
    %811 = vmatprep.subr.mxu0 0.0
    %812 = vmatpush1.msra.mxu0 0.0
    %813 = vmatprep.mubr.f32.mxu0 0.0
    %814 = vmatmul.mubr.f32.gmra.mrb[0].mxu0 %v747
    %v815 = vpop.f32.mrb[0].mxu0
    %v816 = vadd.f32 0.0, %v815
    %v817 = vpop.f32.mrb[0].mxu0
    %818 = vdwg.mxu0
    %v819 = vadd.f32 %v741, %v816
    %v820 = vxor.u32 %v819, 2147483648
    %v821 = vmul.f32 %v820, 1.442695
    %v822 = vpow.pop %v821
    %v823 = vadd.f32 %v822, 1.0
    %v824 = vrcp.pop %v823
    %v825 = vmul.f32 1.0, %v824
    %v826 = vtanh.pop %v819
    %828 = vrot.lane.b32.xlu0 %v745, 32
    %v829 = vpop.permute.xlu0 %828
    %v831 = vmul.f32 %v825, %v829
    %833 = vrot.lane.b32.xlu0 %v826, 64
    %v834 = vpop.permute.xlu0 %833
    %v836 = vmul.f32 %v825, %v834
    %838 = vrot.lane.b32.xlu0 %v836, 32
    %v839 = vpop.permute.xlu0 %838
    %v841 = vadd.f32 %v831, %v839
    %v842 = vtanh.pop %v841
    %844 = vrot.lane.b32.xlu0 %v842, 64
    %v845 = vpop.permute.xlu0 %844
    %v847 = vmul.f32 %v825, %v845
    %849 = vrot.lane.b32.xlu0 %v847, 32
    %v850 = vpop.permute.xlu0 %849
    %v851 = vsel %vm670, %v850, 0
    %853 = vmatprep.subr.mxu0 0.0
    %854 = vmatpush1.msra.mxu0 %v661
    %855 = vmatprep.subr.mxu0 0.0
    %856 = vmatpush1.msra.mxu0 %v662
    %857 = vmatprep.subr.mxu0 0.0
    %858 = vmatpush1.msra.mxu0 %v663
    %859 = vmatprep.subr.mxu0 0.0
    %860 = vmatpush1.msra.mxu0 %v664
    %861 = vmatprep.subr.mxu0 0.0
    %862 = vmatpush1.msra.mxu0 0.0
    %863 = vmatprep.subr.mxu0 0.0
    %864 = vmatpush1.msra.mxu0 0.0
    %865 = vmatprep.subr.mxu0 0.0
    %866 = vmatpush1.msra.mxu0 0.0
    %867 = vmatprep.subr.mxu0 0.0
    %868 = vmatpush1.msra.mxu0 0.0
    %869 = vmatprep.subr.mxu0 0.0
    %870 = vmatpush1.msra.mxu0 0.0
    %871 = vmatprep.subr.mxu0 0.0
    %872 = vmatpush1.msra.mxu0 0.0
    %873 = vmatprep.subr.mxu0 0.0
    %874 = vmatpush1.msra.mxu0 0.0
    %875 = vmatprep.subr.mxu0 0.0
    %876 = vmatpush1.msra.mxu0 0.0
    %877 = vmatprep.subr.mxu0 0.0
    %878 = vmatpush1.msra.mxu0 0.0
    %879 = vmatprep.subr.mxu0 0.0
    %880 = vmatpush1.msra.mxu0 0.0
    %881 = vmatprep.subr.mxu0 0.0
    %882 = vmatpush1.msra.mxu0 0.0
    %883 = vmatprep.subr.mxu0 0.0
    %884 = vmatpush1.msra.mxu0 0.0
    %885 = vmatprep.subr.mxu0 0.0
    %886 = vmatpush1.msra.mxu0 0.0
    %887 = vmatprep.subr.mxu0 0.0
    %888 = vmatpush1.msra.mxu0 0.0
    %889 = vmatprep.subr.mxu0 0.0
    %890 = vmatpush1.msra.mxu0 0.0
    %891 = vmatprep.subr.mxu0 0.0
    %892 = vmatpush1.msra.mxu0 0.0
    %893 = vmatprep.subr.mxu0 0.0
    %894 = vmatpush1.msra.mxu0 0.0
    %895 = vmatprep.subr.mxu0 0.0
    %896 = vmatpush1.msra.mxu0 0.0
    %897 = vmatprep.subr.mxu0 0.0
    %898 = vmatpush1.msra.mxu0 0.0
    %899 = vmatprep.subr.mxu0 0.0
    %900 = vmatpush1.msra.mxu0 0.0
    %901 = vmatprep.subr.mxu0 0.0
    %902 = vmatpush1.msra.mxu0 0.0
    %903 = vmatprep.subr.mxu0 0.0
    %904 = vmatpush1.msra.mxu0 0.0
    %905 = vmatprep.subr.mxu0 0.0
    %906 = vmatpush1.msra.mxu0 0.0
    %907 = vmatprep.subr.mxu0 0.0
    %908 = vmatpush1.msra.mxu0 0.0
    %909 = vmatprep.subr.mxu0 0.0
    %910 = vmatpush1.msra.mxu0 0.0
    %911 = vmatprep.subr.mxu0 0.0
    %912 = vmatpush1.msra.mxu0 0.0
    %913 = vmatprep.subr.mxu0 0.0
    %914 = vmatpush1.msra.mxu0 0.0
    %915 = vmatprep.subr.mxu0 0.0
    %916 = vmatpush1.msra.mxu0 0.0
    %917 = vmatprep.mubr.f32.mxu0 0.0
    %918 = vmatmul.mubr.f32.gmra.mrb[0].mxu0 %v851
    %v919 = vpop.f32.mrb[0].mxu0
    %v920 = vadd.f32 0.0, %v919
    %v921 = vpop.f32.mrb[0].mxu0
    %922 = vdwg.mxu0
    %v924 = vrot.slane %v920, 4
    %v926 = vadd.f32 %v741, %v924
    %v927 = vxor.u32 %v926, 2147483648
    %v928 = vmul.f32 %v927, 1.442695
    %v929 = vpow.pop %v928
    %v930 = vadd.f32 %v929, 1.0
    %v931 = vrcp.pop %v930
    %v932 = vmul.f32 1.0, %v931
    %v933 = vtanh.pop %v926
    %v935 = vrot.slane %v841, 4
    %v937 = vmul.f32 %v932, %v935
    %939 = vrot.lane.b32.xlu0 %v933, 64
    %v940 = vpop.permute.xlu0 %939
    %v942 = vmul.f32 %v932, %v940
    %944 = vrot.lane.b32.xlu0 %v942, 32
    %v945 = vpop.permute.xlu0 %944
    %v947 = vadd.f32 %v937, %v945
    %v948 = vtanh.pop %v947
    %950 = vrot.lane.b32.xlu0 %v948, 64
    %v951 = vpop.permute.xlu0 %950
    %v953 = vmul.f32 %v932, %v951
    %v954 = vsel %vm649, %v847, %v953
    %s955 = scalar_lea.vmem [#allocation11], 32
    %v956 = vld [vmem:[%s955] sm:$0xff]
    %v957 = vld [vmem:[%s955 + $0x8] sm:$0xff]
    %v958 = vld [vmem:[%s955 + $0x10] sm:$0xff]
    %v959 = vld [vmem:[%s955 + $0x18] sm:$0xff]
    %s960 = scalar_lea.vmem [#allocation13], 32
    %v961 = vld [vmem:[%s960] sm:$0xff]
    %v962 = vld [vmem:[%s960 + $0x8] sm:$0xff]
    %v963 = vld [vmem:[%s960 + $0x10] sm:$0xff]
    %v964 = vld [vmem:[%s960 + $0x18] sm:$0xff]
    %v965 = vld [vmem:[%s9 + $0x1] sm:$0x1]
    %v966 = vlaneseq
    %v967 = vshrl.u32 %v966, 7
    %v968 = vsub.s32 0, %v967
    %v969 = vrot.slane %v965, %v968
    %971 = vrot.lane.b32.xlu0 %v954, 32
    %v972 = vpop.permute.xlu0 %971
    %v973 = vsel %vm670, %v972, 0
    %975 = vmatprep.subr.mxu0 0.0
    %976 = vmatpush1.msra.mxu0 %v956
    %977 = vmatprep.subr.mxu0 0.0
    %978 = vmatpush1.msra.mxu0 %v957
    %979 = vmatprep.subr.mxu0 0.0
    %980 = vmatpush1.msra.mxu0 %v958
    %981 = vmatprep.subr.mxu0 0.0
    %982 = vmatpush1.msra.mxu0 %v959
    %983 = vmatprep.subr.mxu0 0.0
    %984 = vmatpush1.msra.mxu0 0.0
    %985 = vmatprep.subr.mxu0 0.0
    %986 = vmatpush1.msra.mxu0 0.0
    %987 = vmatprep.subr.mxu0 0.0
    %988 = vmatpush1.msra.mxu0 0.0
    %989 = vmatprep.subr.mxu0 0.0
    %990 = vmatpush1.msra.mxu0 0.0
    %991 = vmatprep.subr.mxu0 0.0
    %992 = vmatpush1.msra.mxu0 0.0
    %993 = vmatprep.subr.mxu0 0.0
    %994 = vmatpush1.msra.mxu0 0.0
    %995 = vmatprep.subr.mxu0 0.0
    %996 = vmatpush1.msra.mxu0 0.0
    %997 = vmatprep.subr.mxu0 0.0
    %998 = vmatpush1.msra.mxu0 0.0
    %999 = vmatprep.subr.mxu0 0.0
    %1000 = vmatpush1.msra.mxu0 0.0
    %1001 = vmatprep.subr.mxu0 0.0
    %1002 = vmatpush1.msra.mxu0 0.0
    %1003 = vmatprep.subr.mxu0 0.0
    %1004 = vmatpush1.msra.mxu0 0.0
    %1005 = vmatprep.subr.mxu0 0.0
    %1006 = vmatpush1.msra.mxu0 0.0
    %1007 = vmatprep.subr.mxu0 0.0
    %1008 = vmatpush1.msra.mxu0 0.0
    %1009 = vmatprep.subr.mxu0 0.0
    %1010 = vmatpush1.msra.mxu0 0.0
    %1011 = vmatprep.subr.mxu0 0.0
    %1012 = vmatpush1.msra.mxu0 0.0
    %1013 = vmatprep.subr.mxu0 0.0
    %1014 = vmatpush1.msra.mxu0 0.0
    %1015 = vmatprep.subr.mxu0 0.0
    %1016 = vmatpush1.msra.mxu0 0.0
    %1017 = vmatprep.subr.mxu0 0.0
    %1018 = vmatpush1.msra.mxu0 0.0
    %1019 = vmatprep.subr.mxu0 0.0
    %1020 = vmatpush1.msra.mxu0 0.0
    %1021 = vmatprep.subr.mxu0 0.0
    %1022 = vmatpush1.msra.mxu0 0.0
    %1023 = vmatprep.subr.mxu0 0.0
    %1024 = vmatpush1.msra.mxu0 0.0
    %1025 = vmatprep.subr.mxu0 0.0
    %1026 = vmatpush1.msra.mxu0 0.0
    %1027 = vmatprep.subr.mxu0 0.0
    %1028 = vmatpush1.msra.mxu0 0.0
    %1029 = vmatprep.subr.mxu0 0.0
    %1030 = vmatpush1.msra.mxu0 0.0
    %1031 = vmatprep.subr.mxu0 0.0
    %1032 = vmatpush1.msra.mxu0 0.0
    %1033 = vmatprep.subr.mxu0 0.0
    %1034 = vmatpush1.msra.mxu0 0.0
    %1035 = vmatprep.subr.mxu0 0.0
    %1036 = vmatpush1.msra.mxu0 0.0
    %1037 = vmatprep.subr.mxu0 0.0
    %1038 = vmatpush1.msra.mxu0 0.0
    %1039 = vmatprep.mubr.f32.mxu0 0.0
    %1040 = vmatmul.mubr.f32.gmra.mrb[0].mxu0 %v973
    %v1041 = vpop.f32.mrb[0].mxu0
    %v1042 = vadd.f32 %v969, %v1041
    %v1043 = vpop.f32.mrb[0].mxu0
    %1044 = vdwg.mxu0
    %s1045 = scalar_lea.vmem %s5, 4
    %v1046 = vld [vmem:[%s1045] sm:$0xf]
    %s1047 = scalar_lea.vmem %s6, 4
    %v1048 = vld [vmem:[%s1047] sm:$0xf]
    %v1050 = vsel %vm670, %v1046, 0
    %1052 = vmatprep.subr.mxu0 0.0
    %1053 = vmatpush1.msra.mxu0 %v961
    %1054 = vmatprep.subr.mxu0 0.0
    %1055 = vmatpush1.msra.mxu0 %v962
    %1056 = vmatprep.subr.mxu0 0.0
    %1057 = vmatpush1.msra.mxu0 %v963
    %1058 = vmatprep.subr.mxu0 0.0
    %1059 = vmatpush1.msra.mxu0 %v964
    %1060 = vmatprep.subr.mxu0 0.0
    %1061 = vmatpush1.msra.mxu0 0.0
    %1062 = vmatprep.subr.mxu0 0.0
    %1063 = vmatpush1.msra.mxu0 0.0
    %1064 = vmatprep.subr.mxu0 0.0
    %1065 = vmatpush1.msra.mxu0 0.0
    %1066 = vmatprep.subr.mxu0 0.0
    %1067 = vmatpush1.msra.mxu0 0.0
    %1068 = vmatprep.subr.mxu0 0.0
    %1069 = vmatpush1.msra.mxu0 0.0
    %1070 = vmatprep.subr.mxu0 0.0
    %1071 = vmatpush1.msra.mxu0 0.0
    %1072 = vmatprep.subr.mxu0 0.0
    %1073 = vmatpush1.msra.mxu0 0.0
    %1074 = vmatprep.subr.mxu0 0.0
    %1075 = vmatpush1.msra.mxu0 0.0
    %1076 = vmatprep.subr.mxu0 0.0
    %1077 = vmatpush1.msra.mxu0 0.0
    %1078 = vmatprep.subr.mxu0 0.0
    %1079 = vmatpush1.msra.mxu0 0.0
    %1080 = vmatprep.subr.mxu0 0.0
    %1081 = vmatpush1.msra.mxu0 0.0
    %1082 = vmatprep.subr.mxu0 0.0
    %1083 = vmatpush1.msra.mxu0 0.0
    %1084 = vmatprep.subr.mxu0 0.0
    %1085 = vmatpush1.msra.mxu0 0.0
    %1086 = vmatprep.subr.mxu0 0.0
    %1087 = vmatpush1.msra.mxu0 0.0
    %1088 = vmatprep.subr.mxu0 0.0
    %1089 = vmatpush1.msra.mxu0 0.0
    %1090 = vmatprep.subr.mxu0 0.0
    %1091 = vmatpush1.msra.mxu0 0.0
    %1092 = vmatprep.subr.mxu0 0.0
    %1093 = vmatpush1.msra.mxu0 0.0
    %1094 = vmatprep.subr.mxu0 0.0
    %1095 = vmatpush1.msra.mxu0 0.0
    %1096 = vmatprep.subr.mxu0 0.0
    %1097 = vmatpush1.msra.mxu0 0.0
    %1098 = vmatprep.subr.mxu0 0.0
    %1099 = vmatpush1.msra.mxu0 0.0
    %1100 = vmatprep.subr.mxu0 0.0
    %1101 = vmatpush1.msra.mxu0 0.0
    %1102 = vmatprep.subr.mxu0 0.0
    %1103 = vmatpush1.msra.mxu0 0.0
    %1104 = vmatprep.subr.mxu0 0.0
    %1105 = vmatpush1.msra.mxu0 0.0
    %1106 = vmatprep.subr.mxu0 0.0
    %1107 = vmatpush1.msra.mxu0 0.0
    %1108 = vmatprep.subr.mxu0 0.0
    %1109 = vmatpush1.msra.mxu0 0.0
    %1110 = vmatprep.subr.mxu0 0.0
    %1111 = vmatpush1.msra.mxu0 0.0
    %1112 = vmatprep.subr.mxu0 0.0
    %1113 = vmatpush1.msra.mxu0 0.0
    %1114 = vmatprep.subr.mxu0 0.0
    %1115 = vmatpush1.msra.mxu0 0.0
    %1116 = vmatprep.mubr.f32.mxu0 0.0
    %1117 = vmatmul.mubr.f32.gmra.mrb[0].mxu0 %v1050
    %v1118 = vpop.f32.mrb[0].mxu0
    %v1119 = vadd.f32 0.0, %v1118
    %v1120 = vpop.f32.mrb[0].mxu0
    %1121 = vdwg.mxu0
    %v1122 = vadd.f32 %v1042, %v1119
    %v1123 = vxor.u32 %v1122, 2147483648
    %v1124 = vmul.f32 %v1123, 1.442695
    %v1125 = vpow.pop %v1124
    %v1126 = vadd.f32 %v1125, 1.0
    %v1127 = vrcp.pop %v1126
    %v1128 = vmul.f32 1.0, %v1127
    %v1129 = vtanh.pop %v1122
    %1131 = vrot.lane.b32.xlu0 %v1048, 32
    %v1132 = vpop.permute.xlu0 %1131
    %v1134 = vmul.f32 %v1128, %v1132
    %1136 = vrot.lane.b32.xlu0 %v1129, 64
    %v1137 = vpop.permute.xlu0 %1136
    %v1139 = vmul.f32 %v1128, %v1137
    %1141 = vrot.lane.b32.xlu0 %v1139, 32
    %v1142 = vpop.permute.xlu0 %1141
    %v1144 = vadd.f32 %v1134, %v1142
    %v1145 = vtanh.pop %v1144
    %1147 = vrot.lane.b32.xlu0 %v1145, 64
    %v1148 = vpop.permute.xlu0 %1147
    %v1150 = vmul.f32 %v1128, %v1148
    %1152 = vrot.lane.b32.xlu0 %v1150, 32
    %v1153 = vpop.permute.xlu0 %1152
    %v1154 = vsel %vm670, %v1153, 0
    %1156 = vmatprep.subr.mxu0 0.0
    %1157 = vmatpush1.msra.mxu0 %v961
    %1158 = vmatprep.subr.mxu0 0.0
    %1159 = vmatpush1.msra.mxu0 %v962
    %1160 = vmatprep.subr.mxu0 0.0
    %1161 = vmatpush1.msra.mxu0 %v963
    %1162 = vmatprep.subr.mxu0 0.0
    %1163 = vmatpush1.msra.mxu0 %v964
    %1164 = vmatprep.subr.mxu0 0.0
    %1165 = vmatpush1.msra.mxu0 0.0
    %1166 = vmatprep.subr.mxu0 0.0
    %1167 = vmatpush1.msra.mxu0 0.0
    %1168 = vmatprep.subr.mxu0 0.0
    %1169 = vmatpush1.msra.mxu0 0.0
    %1170 = vmatprep.subr.mxu0 0.0
    %1171 = vmatpush1.msra.mxu0 0.0
    %1172 = vmatprep.subr.mxu0 0.0
    %1173 = vmatpush1.msra.mxu0 0.0
    %1174 = vmatprep.subr.mxu0 0.0
    %1175 = vmatpush1.msra.mxu0 0.0
    %1176 = vmatprep.subr.mxu0 0.0
    %1177 = vmatpush1.msra.mxu0 0.0
    %1178 = vmatprep.subr.mxu0 0.0
    %1179 = vmatpush1.msra.mxu0 0.0
    %1180 = vmatprep.subr.mxu0 0.0
    %1181 = vmatpush1.msra.mxu0 0.0
    %1182 = vmatprep.subr.mxu0 0.0
    %1183 = vmatpush1.msra.mxu0 0.0
    %1184 = vmatprep.subr.mxu0 0.0
    %1185 = vmatpush1.msra.mxu0 0.0
    %1186 = vmatprep.subr.mxu0 0.0
    %1187 = vmatpush1.msra.mxu0 0.0
    %1188 = vmatprep.subr.mxu0 0.0
    %1189 = vmatpush1.msra.mxu0 0.0
    %1190 = vmatprep.subr.mxu0 0.0
    %1191 = vmatpush1.msra.mxu0 0.0
    %1192 = vmatprep.subr.mxu0 0.0
    %1193 = vmatpush1.msra.mxu0 0.0
    %1194 = vmatprep.subr.mxu0 0.0
    %1195 = vmatpush1.msra.mxu0 0.0
    %1196 = vmatprep.subr.mxu0 0.0
    %1197 = vmatpush1.msra.mxu0 0.0
    %1198 = vmatprep.subr.mxu0 0.0
    %1199 = vmatpush1.msra.mxu0 0.0
    %1200 = vmatprep.subr.mxu0 0.0
    %1201 = vmatpush1.msra.mxu0 0.0
    %1202 = vmatprep.subr.mxu0 0.0
    %1203 = vmatpush1.msra.mxu0 0.0
    %1204 = vmatprep.subr.mxu0 0.0
    %1205 = vmatpush1.msra.mxu0 0.0
    %1206 = vmatprep.subr.mxu0 0.0
    %1207 = vmatpush1.msra.mxu0 0.0
    %1208 = vmatprep.subr.mxu0 0.0
    %1209 = vmatpush1.msra.mxu0 0.0
    %1210 = vmatprep.subr.mxu0 0.0
    %1211 = vmatpush1.msra.mxu0 0.0
    %1212 = vmatprep.subr.mxu0 0.0
    %1213 = vmatpush1.msra.mxu0 0.0
    %1214 = vmatprep.subr.mxu0 0.0
    %1215 = vmatpush1.msra.mxu0 0.0
    %1216 = vmatprep.subr.mxu0 0.0
    %1217 = vmatpush1.msra.mxu0 0.0
    %1218 = vmatprep.subr.mxu0 0.0
    %1219 = vmatpush1.msra.mxu0 0.0
    %1220 = vmatprep.mubr.f32.mxu0 0.0
    %1221 = vmatmul.mubr.f32.gmra.mrb[0].mxu0 %v1154
    %v1222 = vpop.f32.mrb[0].mxu0
    %v1223 = vadd.f32 0.0, %v1222
    %v1224 = vpop.f32.mrb[0].mxu0
    %1225 = vdwg.mxu0
    %v1227 = vrot.slane %v1223, 4
    %v1229 = vadd.f32 %v1042, %v1227
    %v1230 = vxor.u32 %v1229, 2147483648
    %v1231 = vmul.f32 %v1230, 1.442695
    %v1232 = vpow.pop %v1231
    %v1233 = vadd.f32 %v1232, 1.0
    %v1234 = vrcp.pop %v1233
    %v1235 = vmul.f32 1.0, %v1234
    %v1236 = vtanh.pop %v1229
    %v1238 = vrot.slane %v1144, 4
    %v1240 = vmul.f32 %v1235, %v1238
    %1242 = vrot.lane.b32.xlu0 %v1236, 64
    %v1243 = vpop.permute.xlu0 %1242
    %v1245 = vmul.f32 %v1235, %v1243
    %1247 = vrot.lane.b32.xlu0 %v1245, 32
    %v1248 = vpop.permute.xlu0 %1247
    %v1250 = vadd.f32 %v1240, %v1248
    %v1251 = vtanh.pop %v1250
    %1253 = vrot.lane.b32.xlu0 %v1251, 64
    %v1254 = vpop.permute.xlu0 %1253
    %v1256 = vmul.f32 %v1235, %v1254
    %v1258 = vrot.slane %v1150, 1
    %1259 = vrot.lane.b32.xlu0 %v1258, 64
    %v1260 = vpop.permute.xlu0 %1259
    %v1262 = vrot.slane %v1150, 2
    %1263 = vrot.lane.b32.xlu0 %v1262, 96
    %v1264 = vpop.permute.xlu0 %1263
    %v1266 = vrot.slane %v1150, 3
    %v1268 = vsel %vm670, %v1153, %v1260
    %vm1269 = vcmask 523264
    %v1270 = vsel %vm1269, %v1268, %v1264
    %vm1271 = vcmask 785408
    %v1272 = vsel %vm1271, %v1270, %v1266
    %1274 = vrot.lane.b32.xlu0 %v1256, 32
    %v1275 = vpop.permute.xlu0 %1274
    %v1277 = vrot.slane %v1256, 1
    %1278 = vrot.lane.b32.xlu0 %v1277, 64
    %v1279 = vpop.permute.xlu0 %1278
    %v1281 = vrot.slane %v1256, 2
    %1282 = vrot.lane.b32.xlu0 %v1281, 96
    %v1283 = vpop.permute.xlu0 %1282
    %v1285 = vrot.slane %v1256, 3
    %v1287 = vsel %vm670, %v1275, %v1279
    %v1288 = vsel %vm1269, %v1287, %v1283
    %v1289 = vsel %vm1271, %v1288, %v1285
    %v1291 = vrot.slane %v1289, 3
    %v1293 = vsel %vm643, %v1272, %v1291
    %1294 = vst [vmem:[#allocation14] sm:$0x3] %v1293
    // Predicated region
    $region70: #{tpu_custom_call.1} parent=1 // pred_check
      _
    $region71: #{tpu_custom_call.1} parent=1 // pred_check_branch
      %1296 = sbr.rel (0) target = $region73
    $region72: #{tpu_custom_call.1} parent=1 // pred_region
      %s1298 = ssub.s32 32, 32
      %1299 = vsyncadd [#allocation4], %s1298
      %s1301 = sshll.u32 [#allocation14], 4
      %s1302 = int_to_ptr.vmem [resolvable:$true] %s1301
      %1304 = dma.vmem_to_hbm [thread:$0]  %s1302, 32, %s10, [#allocation4]
    $region73: #{tpu_custom_call.1} parent=1 // pred_fallthru
      _
    // Predicated region
    $region74: #{tpu_custom_call.1} parent=1 // pred_check
      _
    $region75: #{tpu_custom_call.1} parent=1 // pred_check_branch
      %1306 = sbr.rel (0) target = $region77
    $region76: #{tpu_custom_call.1} parent=1 // pred_region
      %1307 = dma.done [#allocation4], 32
    $region77: #{tpu_custom_call.1} parent=1 // pred_fallthru
      _
    %1308 = vsyncpa [#allocation3], 1
    %1309 = vsyncpa [#allocation6], 1
    %1310 = vsyncpa [#allocation9], 1
    %1311 = vsyncpa [#allocation12], 1
    %1312 = vsyncpa [#allocation4], 1

</llo_original>
